<compile_context>
chip_gen: v6e
topology: v6e:2x2x1
jax: 0.10.0
libtpu: 0.0.40
codegen_flags: <defaults>
</compile_context>

<pallas_src>
import functools

import jax
import jax.numpy as jnp
from jax.experimental import pallas as pl
from jax.experimental.pallas import tpu as pltpu


_INT32_MIN = -(2 ** 31)
_INT32_MAX = 2 ** 31 - 1


def _round_up(x, m):
    return (x + m - 1) // m * m


def _grid_mask_kernel(rgb_ref, diff_ref, out_ref, acc_ref, *, tc_total, hw_true):
    """One (batch, TC-chunk) grid step.

    rgb_ref, diff_ref : (1, tc, HW_pad) f32 blocks
    out_ref           : (1, 1, HW_pad) i32 (written only on the last TC step)
    acc_ref           : (1, HW_pad) f32 running sum of (rgb + diff) over T*C
    """
    t = pl.program_id(1)

    @pl.when(t == 0)
    def _():
        acc_ref[...] = jnp.zeros_like(acc_ref)

    # Fused partial sum of (rgb + diff) over this frames*channels chunk.
    # (zero-padded TC rows contribute nothing; divide by the true T*C later.)
    acc_ref[...] += jnp.sum(rgb_ref[0] + diff_ref[0], axis=0, keepdims=True)

    @pl.when(t == pl.num_programs(1) - 1)
    def _():
        overall = acc_ref[...] * jnp.float32(1.0 / tc_total)       # (1, HW_pad)

        # Order-preserving f32 -> int32 key (exact median selection in key
        # space, no float-midpoint convergence issues).
        bits = pltpu.bitcast(overall, jnp.int32)
        key = jnp.where(bits < 0, jnp.int32(_INT32_MIN) - bits, bits)

        # Padded lanes get the largest key so they never count as "<= mid"
        # and never become the median.
        lane = jax.lax.broadcasted_iota(jnp.int32, key.shape, 1)
        key = jnp.where(lane < hw_true, key, jnp.int32(_INT32_MAX))

        # torch.median = LOWER median = smallest key K with
        # count(key <= K) >= k_rank, k_rank = (hw_true - 1) // 2 + 1.
        k_rank = (hw_true - 1) // 2 + 1

        def body(_, carry):
            lo, hi = carry                                          # (1,1) i32
            mid = (lo & hi) + ((lo ^ hi) >> 1)      # overflow-safe floor avg
            cnt = jnp.sum((key <= mid).astype(jnp.int32),
                          axis=1, keepdims=True)                    # (1,1)
            pred = cnt >= k_rank
            return jnp.where(pred, lo, mid), jnp.where(pred, mid, hi)

        lo0 = jnp.full((1, 1), _INT32_MIN, jnp.int32)
        hi0 = jnp.full((1, 1), _INT32_MAX, jnp.int32)
        # 32 halvings of the full int32 range pin hi to the exact median key.
        _, med_key = jax.lax.fori_loop(0, 32, body, (lo0, hi0), unroll=True)

        # Strictly-greater-than-median mask, lane-dense int32 store.
        out_ref[0] = (key > med_key).astype(jnp.int32)              # (1, HW_pad)


def gen_grid_mask(rgb_feature_map, diff_feature_map, *, block_tc=None,
                  vmem_block_budget_bytes=12 * 1024 * 1024):
    """rgb/diff: (B, T, C, H, W) float -> (B, H, W) int32 grid mask."""
    B, T, C, H, W = rgb_feature_map.shape
    assert diff_feature_map.shape == rgb_feature_map.shape
    TC, HW = T * C, H * W
    HW_pad = _round_up(HW, 128)

    # TC chunk sized so 2 inputs x 2 pipeline buffers x (tc, HW_pad) f32 blocks
    # stay within a conservative scoped-VMEM budget (fits v5e 16 MiB default
    # and v7x 64 MiB physical without raising vmem_limit_bytes).
    if block_tc is None:
        max_tc = max(8, (vmem_block_budget_bytes // (2 * 2 * 4 * HW_pad)) // 8 * 8)
        block_tc = min(_round_up(TC, 8), max_tc)
    block_tc = max(8, _round_up(block_tc, 8))
    TC_pad = _round_up(TC, block_tc)
    n_t = TC_pad // block_tc

    def prep(x):
        x = x.reshape(B, TC, HW).astype(jnp.float32)
        # Zero padding: TC rows are sum-neutral; HW lanes are masked in-kernel.
        return jnp.pad(x, ((0, 0), (0, TC_pad - TC), (0, HW_pad - HW)))

    rgb = prep(rgb_feature_map)
    diff = prep(diff_feature_map)

    kernel = functools.partial(_grid_mask_kernel, tc_total=TC, hw_true=HW)

    out = pl.pallas_call(
        kernel,
        out_shape=jax.ShapeDtypeStruct((B, 1, HW_pad), jnp.int32),
        grid_spec=pltpu.PrefetchScalarGridSpec(
            num_scalar_prefetch=0,
            grid=(B, n_t),
            in_specs=[
                pl.BlockSpec((1, block_tc, HW_pad), lambda b, t: (b, t, 0)),
                pl.BlockSpec((1, block_tc, HW_pad), lambda b, t: (b, t, 0)),
            ],
            out_specs=pl.BlockSpec((1, 1, HW_pad), lambda b, t: (b, 0, 0)),
            scratch_shapes=[pltpu.VMEM((1, HW_pad), jnp.float32)],
        ),
        compiler_params=pltpu.CompilerParams(
            dimension_semantics=("parallel", "arbitrary")),
        # TODO(synk): for B==1 on v7x, additionally shard the TC/HW axis across
        # the two TensorCores (core_parallel) to avoid leaving one core idle.
    )(rgb, diff)

    return out[:, 0, :HW].reshape(B, H, W)


if __name__ == "__main__":
    key = jax.random.PRNGKey(0)
    k1, k2 = jax.random.split(key)
    # HW = 14*14 = 196 exercises the lane-padding path (padded to 256 lanes).
    B, T, C, H, W = 2, 4, 8, 14, 14
    rgb = jax.random.normal(k1, (B, T, C, H, W), jnp.float32)
    diff = jax.random.normal(k2, (B, T, C, H, W), jnp.float32)

    out = gen_grid_mask(rgb, diff)                       # single TC chunk
    out_tiled = gen_grid_mask(rgb, diff, block_tc=8)     # 4 reduction steps
    jax.block_until_ready((out, out_tiled))

    # Pure-JAX reference with torch-style lower-median semantics.
    ref_overall = rgb.mean(axis=1).mean(axis=1) + diff.mean(axis=1).mean(axis=1)
    flat = ref_overall.reshape(B, -1)
    med = jnp.sort(flat, axis=-1)[:, (H * W - 1) // 2]
    ref_mask = (ref_overall > med[:, None, None]).astype(jnp.int32)

    assert out.shape == (B, H, W) and out.dtype == jnp.int32
    assert bool(jnp.array_equal(out, ref_mask))
    assert bool(jnp.array_equal(out_tiled, ref_mask))

    print("KERNEL_OK")
</pallas_src>

<mosaic_0001>
module attributes {stable_mosaic.version = 11 : i64} {
  func.func @_grid_mask_kernel(%arg0: i32, %arg1: i32, %arg2: memref<1x32x256xf32, #tpu.memory_space<vmem>>, %arg3: memref<1x32x256xf32, #tpu.memory_space<vmem>>, %arg4: memref<1x1x256xi32, #tpu.memory_space<vmem>>, %arg5: memref<1x256xf32, #tpu.memory_space<vmem>>) attributes {dimension_semantics = [#tpu.dimension_semantics<parallel>, #tpu.dimension_semantics<arbitrary>], iteration_bounds = array<i64: 2, 1>, scalar_prefetch = 0 : i64, scratch_operands = 1 : i64, tpu.core_type = #tpu.core_type<tc>, window_params = [{transform_indices = @transform_0, window_bounds = array<i64: 1, 32, 256>}, {transform_indices = @transform_1, window_bounds = array<i64: 1, 32, 256>}, {transform_indices = @transform_2, window_bounds = array<i64: 1, 1, 256>}]} {
    %c0_i32 = arith.constant 0 : i32
    %0 = arith.cmpi eq, %arg1, %c0_i32 : i32
    %1 = arith.extui %0 : i1 to i32
    %c0_i32_0 = arith.constant 0 : i32
    %2 = arith.cmpi ne, %1, %c0_i32_0 : i32
    scf.if %2 {
      %cst_12 = arith.constant 0.000000e+00 : f32
      %16 = vector.broadcast %cst_12 : f32 to vector<1x256xf32>
      %c0_13 = arith.constant 0 : index
      %c0_14 = arith.constant 0 : index
      %17 = vector.load %arg5[%c0_13, %c0_14] : memref<1x256xf32, #tpu.memory_space<vmem>>, vector<1x256xf32>
      tpu.vector_store %arg5[%c0_13, %c0_14], %16 {strides = array<i32>} : memref<1x256xf32, #tpu.memory_space<vmem>>, vector<1x256xf32>,
    } else {
    }
    %c0 = arith.constant 0 : index
    %c0_1 = arith.constant 0 : index
    %3 = vector.load %arg5[%c0, %c0_1] : memref<1x256xf32, #tpu.memory_space<vmem>>, vector<1x256xf32>
    %c0_2 = arith.constant 0 : index
    %c0_3 = arith.constant 0 : index
    %c0_4 = arith.constant 0 : index
    %4 = vector.load %arg2[%c0_2, %c0_3, %c0_4] : memref<1x32x256xf32, #tpu.memory_space<vmem>>, vector<1x32x256xf32>
    %5 = vector.shape_cast %4 : vector<1x32x256xf32> to vector<32x256xf32>
    %c0_5 = arith.constant 0 : index
    %c0_6 = arith.constant 0 : index
    %c0_7 = arith.constant 0 : index
    %6 = vector.load %arg3[%c0_5, %c0_6, %c0_7] : memref<1x32x256xf32, #tpu.memory_space<vmem>>, vector<1x32x256xf32>
    %7 = vector.shape_cast %6 : vector<1x32x256xf32> to vector<32x256xf32>
    %8 = arith.addf %5, %7 : vector<32x256xf32>
    %cst = arith.constant dense<0.000000e+00> : vector<256xf32>
    %9 = vector.multi_reduction <add>, %8, %cst [0] : vector<32x256xf32> to vector<256xf32>
    %10 = vector.shape_cast %9 : vector<256xf32> to vector<1x256xf32>
    %11 = arith.addf %3, %10 : vector<1x256xf32>
    %c0_8 = arith.constant 0 : index
    %c0_9 = arith.constant 0 : index
    %12 = vector.load %arg5[%c0_8, %c0_9] : memref<1x256xf32, #tpu.memory_space<vmem>>, vector<1x256xf32>
    tpu.vector_store %arg5[%c0_8, %c0_9], %11 {strides = array<i32>} : memref<1x256xf32, #tpu.memory_space<vmem>>, vector<1x256xf32>,
    %c0_i32_10 = arith.constant 0 : i32
    %13 = arith.cmpi eq, %arg1, %c0_i32_10 : i32
    %14 = arith.extui %13 : i1 to i32
    %c0_i32_11 = arith.constant 0 : i32
    %15 = arith.cmpi ne, %14, %c0_i32_11 : i32
    scf.if %15 {
      %c0_12 = arith.constant 0 : index
      %c0_13 = arith.constant 0 : index
      %16 = vector.load %arg5[%c0_12, %c0_13] : memref<1x256xf32, #tpu.memory_space<vmem>>, vector<1x256xf32>
      %cst_14 = arith.constant 3.125000e-02 : f32
      %17 = vector.broadcast %cst_14 : f32 to vector<1x256xf32>
      %18 = arith.mulf %16, %17 : vector<1x256xf32>
      %19 = tpu.bitcast %18 : vector<1x256xf32> -> vector<1x256xi32>
      %c0_i32_15 = arith.constant 0 : i32
      %20 = vector.broadcast %c0_i32_15 : i32 to vector<1x256xi32>
      %21 = arith.cmpi slt, %19, %20 : vector<1x256xi32>
      %c-2147483648_i32 = arith.constant -2147483648 : i32
      %22 = vector.broadcast %c-2147483648_i32 : i32 to vector<1x256xi32>
      %23 = arith.subi %22, %19 : vector<1x256xi32>
      %24 = arith.select %21, %23, %19 : vector<1x256xi1>, vector<1x256xi32>
      %25 = tpu.iota {dimensions = array<i32: 1>} : vector<1x256xi32>
      %c196_i32 = arith.constant 196 : i32
      %26 = vector.broadcast %c196_i32 : i32 to vector<1x256xi32>
      %27 = arith.cmpi slt, %25, %26 : vector<1x256xi32>
      %c2147483647_i32 = arith.constant 2147483647 : i32
      %28 = vector.broadcast %c2147483647_i32 : i32 to vector<1x256xi32>
      %29 = arith.select %27, %24, %28 : vector<1x256xi1>, vector<1x256xi32>
      %c-2147483648_i32_16 = arith.constant -2147483648 : i32
      %30 = vector.broadcast %c-2147483648_i32_16 : i32 to vector<1x1xi32>
      %c2147483647_i32_17 = arith.constant 2147483647 : i32
      %31 = vector.broadcast %c2147483647_i32_17 : i32 to vector<1x1xi32>
      %c0_i32_18 = arith.constant 0 : i32
      %32 = arith.andi %30, %31 : vector<1x1xi32>
      %33 = arith.xori %30, %31 : vector<1x1xi32>
      %c1_i32 = arith.constant 1 : i32
      %34 = vector.broadcast %c1_i32 : i32 to vector<1x1xi32>
      %35 = arith.shrsi %33, %34 : vector<1x1xi32>
      %36 = arith.addi %32, %35 : vector<1x1xi32>
      %37 = vector.broadcast %36 : vector<1x1xi32> to vector<1x256xi32>
      %38 = arith.cmpi sle, %29, %37 : vector<1x256xi32>
      %39 = arith.extui %38 : vector<1x256xi1> to vector<1x256xi32>
      %cst_19 = arith.constant dense<0> : vector<1xi32>
      %40 = vector.multi_reduction <add>, %39, %cst_19 [1] : vector<1x256xi32> to vector<1xi32>
      %41 = vector.shape_cast %40 : vector<1xi32> to vector<1x1xi32>
      %c98_i32 = arith.constant 98 : i32
      %42 = vector.broadcast %c98_i32 : i32 to vector<1x1xi32>
      %43 = arith.cmpi sge, %41, %42 : vector<1x1xi32>
      %44 = arith.select %43, %30, %36 : vector<1x1xi1>, vector<1x1xi32>
      %45 = arith.select %43, %36, %31 : vector<1x1xi1>, vector<1x1xi32>
      %c1_i32_20 = arith.constant 1 : i32
      %46 = arith.andi %44, %45 : vector<1x1xi32>
      %47 = arith.xori %44, %45 : vector<1x1xi32>
      %c1_i32_21 = arith.constant 1 : i32
      %48 = vector.broadcast %c1_i32_21 : i32 to vector<1x1xi32>
      %49 = arith.shrsi %47, %48 : vector<1x1xi32>
      %50 = arith.addi %46, %49 : vector<1x1xi32>
      %51 = vector.broadcast %50 : vector<1x1xi32> to vector<1x256xi32>
      %52 = arith.cmpi sle, %29, %51 : vector<1x256xi32>
      %53 = arith.extui %52 : vector<1x256xi1> to vector<1x256xi32>
      %cst_22 = arith.constant dense<0> : vector<1xi32>
      %54 = vector.multi_reduction <add>, %53, %cst_22 [1] : vector<1x256xi32> to vector<1xi32>
      %55 = vector.shape_cast %54 : vector<1xi32> to vector<1x1xi32>
      %c98_i32_23 = arith.constant 98 : i32
      %56 = vector.broadcast %c98_i32_23 : i32 to vector<1x1xi32>
      %57 = arith.cmpi sge, %55, %56 : vector<1x1xi32>
      %58 = arith.select %57, %44, %50 : vector<1x1xi1>, vector<1x1xi32>
      %59 = arith.select %57, %50, %45 : vector<1x1xi1>, vector<1x1xi32>
      %c2_i32 = arith.constant 2 : i32
      %60 = arith.andi %58, %59 : vector<1x1xi32>
      %61 = arith.xori %58, %59 : vector<1x1xi32>
      %c1_i32_24 = arith.constant 1 : i32
      %62 = vector.broadcast %c1_i32_24 : i32 to vector<1x1xi32>
      %63 = arith.shrsi %61, %62 : vector<1x1xi32>
      %64 = arith.addi %60, %63 : vector<1x1xi32>
      %65 = vector.broadcast %64 : vector<1x1xi32> to vector<1x256xi32>
      %66 = arith.cmpi sle, %29, %65 : vector<1x256xi32>
      %67 = arith.extui %66 : vector<1x256xi1> to vector<1x256xi32>
      %cst_25 = arith.constant dense<0> : vector<1xi32>
      %68 = vector.multi_reduction <add>, %67, %cst_25 [1] : vector<1x256xi32> to vector<1xi32>
      %69 = vector.shape_cast %68 : vector<1xi32> to vector<1x1xi32>
      %c98_i32_26 = arith.constant 98 : i32
      %70 = vector.broadcast %c98_i32_26 : i32 to vector<1x1xi32>
      %71 = arith.cmpi sge, %69, %70 : vector<1x1xi32>
      %72 = arith.select %71, %58, %64 : vector<1x1xi1>, vector<1x1xi32>
      %73 = arith.select %71, %64, %59 : vector<1x1xi1>, vector<1x1xi32>
      %c3_i32 = arith.constant 3 : i32
      %74 = arith.andi %72, %73 : vector<1x1xi32>
      %75 = arith.xori %72, %73 : vector<1x1xi32>
      %c1_i32_27 = arith.constant 1 : i32
      %76 = vector.broadcast %c1_i32_27 : i32 to vector<1x1xi32>
      %77 = arith.shrsi %75, %76 : vector<1x1xi32>
      %78 = arith.addi %74, %77 : vector<1x1xi32>
      %79 = vector.broadcast %78 : vector<1x1xi32> to vector<1x256xi32>
      %80 = arith.cmpi sle, %29, %79 : vector<1x256xi32>
      %81 = arith.extui %80 : vector<1x256xi1> to vector<1x256xi32>
      %cst_28 = arith.constant dense<0> : vector<1xi32>
      %82 = vector.multi_reduction <add>, %81, %cst_28 [1] : vector<1x256xi32> to vector<1xi32>
      %83 = vector.shape_cast %82 : vector<1xi32> to vector<1x1xi32>
      %c98_i32_29 = arith.constant 98 : i32
      %84 = vector.broadcast %c98_i32_29 : i32 to vector<1x1xi32>
      %85 = arith.cmpi sge, %83, %84 : vector<1x1xi32>
      %86 = arith.select %85, %72, %78 : vector<1x1xi1>, vector<1x1xi32>
      %87 = arith.select %85, %78, %73 : vector<1x1xi1>, vector<1x1xi32>
      %c4_i32 = arith.constant 4 : i32
      %88 = arith.andi %86, %87 : vector<1x1xi32>
      %89 = arith.xori %86, %87 : vector<1x1xi32>
      %c1_i32_30 = arith.constant 1 : i32
      %90 = vector.broadcast %c1_i32_30 : i32 to vector<1x1xi32>
      %91 = arith.shrsi %89, %90 : vector<1x1xi32>
      %92 = arith.addi %88, %91 : vector<1x1xi32>
      %93 = vector.broadcast %92 : vector<1x1xi32> to vector<1x256xi32>
      %94 = arith.cmpi sle, %29, %93 : vector<1x256xi32>
      %95 = arith.extui %94 : vector<1x256xi1> to vector<1x256xi32>
      %cst_31 = arith.constant dense<0> : vector<1xi32>
      %96 = vector.multi_reduction <add>, %95, %cst_31 [1] : vector<1x256xi32> to vector<1xi32>
      %97 = vector.shape_cast %96 : vector<1xi32> to vector<1x1xi32>
      %c98_i32_32 = arith.constant 98 : i32
      %98 = vector.broadcast %c98_i32_32 : i32 to vector<1x1xi32>
      %99 = arith.cmpi sge, %97, %98 : vector<1x1xi32>
      %100 = arith.select %99, %86, %92 : vector<1x1xi1>, vector<1x1xi32>
      %101 = arith.select %99, %92, %87 : vector<1x1xi1>, vector<1x1xi32>
      %c5_i32 = arith.constant 5 : i32
      %102 = arith.andi %100, %101 : vector<1x1xi32>
      %103 = arith.xori %100, %101 : vector<1x1xi32>
      %c1_i32_33 = arith.constant 1 : i32
      %104 = vector.broadcast %c1_i32_33 : i32 to vector<1x1xi32>
      %105 = arith.shrsi %103, %104 : vector<1x1xi32>
      %106 = arith.addi %102, %105 : vector<1x1xi32>
      %107 = vector.broadcast %106 : vector<1x1xi32> to vector<1x256xi32>
      %108 = arith.cmpi sle, %29, %107 : vector<1x256xi32>
      %109 = arith.extui %108 : vector<1x256xi1> to vector<1x256xi32>
      %cst_34 = arith.constant dense<0> : vector<1xi32>
      %110 = vector.multi_reduction <add>, %109, %cst_34 [1] : vector<1x256xi32> to vector<1xi32>
      %111 = vector.shape_cast %110 : vector<1xi32> to vector<1x1xi32>
      %c98_i32_35 = arith.constant 98 : i32
      %112 = vector.broadcast %c98_i32_35 : i32 to vector<1x1xi32>
      %113 = arith.cmpi sge, %111, %112 : vector<1x1xi32>
      %114 = arith.select %113, %100, %106 : vector<1x1xi1>, vector<1x1xi32>
      %115 = arith.select %113, %106, %101 : vector<1x1xi1>, vector<1x1xi32>
      %c6_i32 = arith.constant 6 : i32
      %116 = arith.andi %114, %115 : vector<1x1xi32>
      %117 = arith.xori %114, %115 : vector<1x1xi32>
      %c1_i32_36 = arith.constant 1 : i32
      %118 = vector.broadcast %c1_i32_36 : i32 to vector<1x1xi32>
      %119 = arith.shrsi %117, %118 : vector<1x1xi32>
      %120 = arith.addi %116, %119 : vector<1x1xi32>
      %121 = vector.broadcast %120 : vector<1x1xi32> to vector<1x256xi32>
      %122 = arith.cmpi sle, %29, %121 : vector<1x256xi32>
      %123 = arith.extui %122 : vector<1x256xi1> to vector<1x256xi32>
      %cst_37 = arith.constant dense<0> : vector<1xi32>
      %124 = vector.multi_reduction <add>, %123, %cst_37 [1] : vector<1x256xi32> to vector<1xi32>
      %125 = vector.shape_cast %124 : vector<1xi32> to vector<1x1xi32>
      %c98_i32_38 = arith.constant 98 : i32
      %126 = vector.broadcast %c98_i32_38 : i32 to vector<1x1xi32>
      %127 = arith.cmpi sge, %125, %126 : vector<1x1xi32>
      %128 = arith.select %127, %114, %120 : vector<1x1xi1>, vector<1x1xi32>
      %129 = arith.select %127, %120, %115 : vector<1x1xi1>, vector<1x1xi32>
      %c7_i32 = arith.constant 7 : i32
      %130 = arith.andi %128, %129 : vector<1x1xi32>
      %131 = arith.xori %128, %129 : vector<1x1xi32>
      %c1_i32_39 = arith.constant 1 : i32
      %132 = vector.broadcast %c1_i32_39 : i32 to vector<1x1xi32>
      %133 = arith.shrsi %131, %132 : vector<1x1xi32>
      %134 = arith.addi %130, %133 : vector<1x1xi32>
      %135 = vector.broadcast %134 : vector<1x1xi32> to vector<1x256xi32>
      %136 = arith.cmpi sle, %29, %135 : vector<1x256xi32>
      %137 = arith.extui %136 : vector<1x256xi1> to vector<1x256xi32>
      %cst_40 = arith.constant dense<0> : vector<1xi32>
      %138 = vector.multi_reduction <add>, %137, %cst_40 [1] : vector<1x256xi32> to vector<1xi32>
      %139 = vector.shape_cast %138 : vector<1xi32> to vector<1x1xi32>
      %c98_i32_41 = arith.constant 98 : i32
      %140 = vector.broadcast %c98_i32_41 : i32 to vector<1x1xi32>
      %141 = arith.cmpi sge, %139, %140 : vector<1x1xi32>
      %142 = arith.select %141, %128, %134 : vector<1x1xi1>, vector<1x1xi32>
      %143 = arith.select %141, %134, %129 : vector<1x1xi1>, vector<1x1xi32>
      %c8_i32 = arith.constant 8 : i32
      %144 = arith.andi %142, %143 : vector<1x1xi32>
      %145 = arith.xori %142, %143 : vector<1x1xi32>
      %c1_i32_42 = arith.constant 1 : i32
      %146 = vector.broadcast %c1_i32_42 : i32 to vector<1x1xi32>
      %147 = arith.shrsi %145, %146 : vector<1x1xi32>
      %148 = arith.addi %144, %147 : vector<1x1xi32>
      %149 = vector.broadcast %148 : vector<1x1xi32> to vector<1x256xi32>
      %150 = arith.cmpi sle, %29, %149 : vector<1x256xi32>
      %151 = arith.extui %150 : vector<1x256xi1> to vector<1x256xi32>
      %cst_43 = arith.constant dense<0> : vector<1xi32>
      %152 = vector.multi_reduction <add>, %151, %cst_43 [1] : vector<1x256xi32> to vector<1xi32>
      %153 = vector.shape_cast %152 : vector<1xi32> to vector<1x1xi32>
      %c98_i32_44 = arith.constant 98 : i32
      %154 = vector.broadcast %c98_i32_44 : i32 to vector<1x1xi32>
      %155 = arith.cmpi sge, %153, %154 : vector<1x1xi32>
      %156 = arith.select %155, %142, %148 : vector<1x1xi1>, vector<1x1xi32>
      %157 = arith.select %155, %148, %143 : vector<1x1xi1>, vector<1x1xi32>
      %c9_i32 = arith.constant 9 : i32
      %158 = arith.andi %156, %157 : vector<1x1xi32>
      %159 = arith.xori %156, %157 : vector<1x1xi32>
      %c1_i32_45 = arith.constant 1 : i32
      %160 = vector.broadcast %c1_i32_45 : i32 to vector<1x1xi32>
      %161 = arith.shrsi %159, %160 : vector<1x1xi32>
      %162 = arith.addi %158, %161 : vector<1x1xi32>
      %163 = vector.broadcast %162 : vector<1x1xi32> to vector<1x256xi32>
      %164 = arith.cmpi sle, %29, %163 : vector<1x256xi32>
      %165 = arith.extui %164 : vector<1x256xi1> to vector<1x256xi32>
      %cst_46 = arith.constant dense<0> : vector<1xi32>
      %166 = vector.multi_reduction <add>, %165, %cst_46 [1] : vector<1x256xi32> to vector<1xi32>
      %167 = vector.shape_cast %166 : vector<1xi32> to vector<1x1xi32>
      %c98_i32_47 = arith.constant 98 : i32
      %168 = vector.broadcast %c98_i32_47 : i32 to vector<1x1xi32>
      %169 = arith.cmpi sge, %167, %168 : vector<1x1xi32>
      %170 = arith.select %169, %156, %162 : vector<1x1xi1>, vector<1x1xi32>
      %171 = arith.select %169, %162, %157 : vector<1x1xi1>, vector<1x1xi32>
      %c10_i32 = arith.constant 10 : i32
      %172 = arith.andi %170, %171 : vector<1x1xi32>
      %173 = arith.xori %170, %171 : vector<1x1xi32>
      %c1_i32_48 = arith.constant 1 : i32
      %174 = vector.broadcast %c1_i32_48 : i32 to vector<1x1xi32>
      %175 = arith.shrsi %173, %174 : vector<1x1xi32>
      %176 = arith.addi %172, %175 : vector<1x1xi32>
      %177 = vector.broadcast %176 : vector<1x1xi32> to vector<1x256xi32>
      %178 = arith.cmpi sle, %29, %177 : vector<1x256xi32>
      %179 = arith.extui %178 : vector<1x256xi1> to vector<1x256xi32>
      %cst_49 = arith.constant dense<0> : vector<1xi32>
      %180 = vector.multi_reduction <add>, %179, %cst_49 [1] : vector<1x256xi32> to vector<1xi32>
      %181 = vector.shape_cast %180 : vector<1xi32> to vector<1x1xi32>
      %c98_i32_50 = arith.constant 98 : i32
      %182 = vector.broadcast %c98_i32_50 : i32 to vector<1x1xi32>
      %183 = arith.cmpi sge, %181, %182 : vector<1x1xi32>
      %184 = arith.select %183, %170, %176 : vector<1x1xi1>, vector<1x1xi32>
      %185 = arith.select %183, %176, %171 : vector<1x1xi1>, vector<1x1xi32>
      %c11_i32 = arith.constant 11 : i32
      %186 = arith.andi %184, %185 : vector<1x1xi32>
      %187 = arith.xori %184, %185 : vector<1x1xi32>
      %c1_i32_51 = arith.constant 1 : i32
      %188 = vector.broadcast %c1_i32_51 : i32 to vector<1x1xi32>
      %189 = arith.shrsi %187, %188 : vector<1x1xi32>
      %190 = arith.addi %186, %189 : vector<1x1xi32>
      %191 = vector.broadcast %190 : vector<1x1xi32> to vector<1x256xi32>
      %192 = arith.cmpi sle, %29, %191 : vector<1x256xi32>
      %193 = arith.extui %192 : vector<1x256xi1> to vector<1x256xi32>
      %cst_52 = arith.constant dense<0> : vector<1xi32>
      %194 = vector.multi_reduction <add>, %193, %cst_52 [1] : vector<1x256xi32> to vector<1xi32>
      %195 = vector.shape_cast %194 : vector<1xi32> to vector<1x1xi32>
      %c98_i32_53 = arith.constant 98 : i32
      %196 = vector.broadcast %c98_i32_53 : i32 to vector<1x1xi32>
      %197 = arith.cmpi sge, %195, %196 : vector<1x1xi32>
      %198 = arith.select %197, %184, %190 : vector<1x1xi1>, vector<1x1xi32>
      %199 = arith.select %197, %190, %185 : vector<1x1xi1>, vector<1x1xi32>
      %c12_i32 = arith.constant 12 : i32
      %200 = arith.andi %198, %199 : vector<1x1xi32>
      %201 = arith.xori %198, %199 : vector<1x1xi32>
      %c1_i32_54 = arith.constant 1 : i32
      %202 = vector.broadcast %c1_i32_54 : i32 to vector<1x1xi32>
      %203 = arith.shrsi %201, %202 : vector<1x1xi32>
      %204 = arith.addi %200, %203 : vector<1x1xi32>
      %205 = vector.broadcast %204 : vector<1x1xi32> to vector<1x256xi32>
      %206 = arith.cmpi sle, %29, %205 : vector<1x256xi32>
      %207 = arith.extui %206 : vector<1x256xi1> to vector<1x256xi32>
      %cst_55 = arith.constant dense<0> : vector<1xi32>
      %208 = vector.multi_reduction <add>, %207, %cst_55 [1] : vector<1x256xi32> to vector<1xi32>
      %209 = vector.shape_cast %208 : vector<1xi32> to vector<1x1xi32>
      %c98_i32_56 = arith.constant 98 : i32
      %210 = vector.broadcast %c98_i32_56 : i32 to vector<1x1xi32>
      %211 = arith.cmpi sge, %209, %210 : vector<1x1xi32>
      %212 = arith.select %211, %198, %204 : vector<1x1xi1>, vector<1x1xi32>
      %213 = arith.select %211, %204, %199 : vector<1x1xi1>, vector<1x1xi32>
      %c13_i32 = arith.constant 13 : i32
      %214 = arith.andi %212, %213 : vector<1x1xi32>
      %215 = arith.xori %212, %213 : vector<1x1xi32>
      %c1_i32_57 = arith.constant 1 : i32
      %216 = vector.broadcast %c1_i32_57 : i32 to vector<1x1xi32>
      %217 = arith.shrsi %215, %216 : vector<1x1xi32>
      %218 = arith.addi %214, %217 : vector<1x1xi32>
      %219 = vector.broadcast %218 : vector<1x1xi32> to vector<1x256xi32>
      %220 = arith.cmpi sle, %29, %219 : vector<1x256xi32>
      %221 = arith.extui %220 : vector<1x256xi1> to vector<1x256xi32>
      %cst_58 = arith.constant dense<0> : vector<1xi32>
      %222 = vector.multi_reduction <add>, %221, %cst_58 [1] : vector<1x256xi32> to vector<1xi32>
      %223 = vector.shape_cast %222 : vector<1xi32> to vector<1x1xi32>
      %c98_i32_59 = arith.constant 98 : i32
      %224 = vector.broadcast %c98_i32_59 : i32 to vector<1x1xi32>
      %225 = arith.cmpi sge, %223, %224 : vector<1x1xi32>
      %226 = arith.select %225, %212, %218 : vector<1x1xi1>, vector<1x1xi32>
      %227 = arith.select %225, %218, %213 : vector<1x1xi1>, vector<1x1xi32>
      %c14_i32 = arith.constant 14 : i32
      %228 = arith.andi %226, %227 : vector<1x1xi32>
      %229 = arith.xori %226, %227 : vector<1x1xi32>
      %c1_i32_60 = arith.constant 1 : i32
      %230 = vector.broadcast %c1_i32_60 : i32 to vector<1x1xi32>
      %231 = arith.shrsi %229, %230 : vector<1x1xi32>
      %232 = arith.addi %228, %231 : vector<1x1xi32>
      %233 = vector.broadcast %232 : vector<1x1xi32> to vector<1x256xi32>
      %234 = arith.cmpi sle, %29, %233 : vector<1x256xi32>
      %235 = arith.extui %234 : vector<1x256xi1> to vector<1x256xi32>
      %cst_61 = arith.constant dense<0> : vector<1xi32>
      %236 = vector.multi_reduction <add>, %235, %cst_61 [1] : vector<1x256xi32> to vector<1xi32>
      %237 = vector.shape_cast %236 : vector<1xi32> to vector<1x1xi32>
      %c98_i32_62 = arith.constant 98 : i32
      %238 = vector.broadcast %c98_i32_62 : i32 to vector<1x1xi32>
      %239 = arith.cmpi sge, %237, %238 : vector<1x1xi32>
      %240 = arith.select %239, %226, %232 : vector<1x1xi1>, vector<1x1xi32>
      %241 = arith.select %239, %232, %227 : vector<1x1xi1>, vector<1x1xi32>
      %c15_i32 = arith.constant 15 : i32
      %242 = arith.andi %240, %241 : vector<1x1xi32>
      %243 = arith.xori %240, %241 : vector<1x1xi32>
      %c1_i32_63 = arith.constant 1 : i32
      %244 = vector.broadcast %c1_i32_63 : i32 to vector<1x1xi32>
      %245 = arith.shrsi %243, %244 : vector<1x1xi32>
      %246 = arith.addi %242, %245 : vector<1x1xi32>
      %247 = vector.broadcast %246 : vector<1x1xi32> to vector<1x256xi32>
      %248 = arith.cmpi sle, %29, %247 : vector<1x256xi32>
      %249 = arith.extui %248 : vector<1x256xi1> to vector<1x256xi32>
      %cst_64 = arith.constant dense<0> : vector<1xi32>
      %250 = vector.multi_reduction <add>, %249, %cst_64 [1] : vector<1x256xi32> to vector<1xi32>
      %251 = vector.shape_cast %250 : vector<1xi32> to vector<1x1xi32>
      %c98_i32_65 = arith.constant 98 : i32
      %252 = vector.broadcast %c98_i32_65 : i32 to vector<1x1xi32>
      %253 = arith.cmpi sge, %251, %252 : vector<1x1xi32>
      %254 = arith.select %253, %240, %246 : vector<1x1xi1>, vector<1x1xi32>
      %255 = arith.select %253, %246, %241 : vector<1x1xi1>, vector<1x1xi32>
      %c16_i32 = arith.constant 16 : i32
      %256 = arith.andi %254, %255 : vector<1x1xi32>
      %257 = arith.xori %254, %255 : vector<1x1xi32>
      %c1_i32_66 = arith.constant 1 : i32
      %258 = vector.broadcast %c1_i32_66 : i32 to vector<1x1xi32>
      %259 = arith.shrsi %257, %258 : vector<1x1xi32>
      %260 = arith.addi %256, %259 : vector<1x1xi32>
      %261 = vector.broadcast %260 : vector<1x1xi32> to vector<1x256xi32>
      %262 = arith.cmpi sle, %29, %261 : vector<1x256xi32>
      %263 = arith.extui %262 : vector<1x256xi1> to vector<1x256xi32>
      %cst_67 = arith.constant dense<0> : vector<1xi32>
      %264 = vector.multi_reduction <add>, %263, %cst_67 [1] : vector<1x256xi32> to vector<1xi32>
      %265 = vector.shape_cast %264 : vector<1xi32> to vector<1x1xi32>
      %c98_i32_68 = arith.constant 98 : i32
      %266 = vector.broadcast %c98_i32_68 : i32 to vector<1x1xi32>
      %267 = arith.cmpi sge, %265, %266 : vector<1x1xi32>
      %268 = arith.select %267, %254, %260 : vector<1x1xi1>, vector<1x1xi32>
      %269 = arith.select %267, %260, %255 : vector<1x1xi1>, vector<1x1xi32>
      %c17_i32 = arith.constant 17 : i32
      %270 = arith.andi %268, %269 : vector<1x1xi32>
      %271 = arith.xori %268, %269 : vector<1x1xi32>
      %c1_i32_69 = arith.constant 1 : i32
      %272 = vector.broadcast %c1_i32_69 : i32 to vector<1x1xi32>
      %273 = arith.shrsi %271, %272 : vector<1x1xi32>
      %274 = arith.addi %270, %273 : vector<1x1xi32>
      %275 = vector.broadcast %274 : vector<1x1xi32> to vector<1x256xi32>
      %276 = arith.cmpi sle, %29, %275 : vector<1x256xi32>
      %277 = arith.extui %276 : vector<1x256xi1> to vector<1x256xi32>
      %cst_70 = arith.constant dense<0> : vector<1xi32>
      %278 = vector.multi_reduction <add>, %277, %cst_70 [1] : vector<1x256xi32> to vector<1xi32>
      %279 = vector.shape_cast %278 : vector<1xi32> to vector<1x1xi32>
      %c98_i32_71 = arith.constant 98 : i32
      %280 = vector.broadcast %c98_i32_71 : i32 to vector<1x1xi32>
      %281 = arith.cmpi sge, %279, %280 : vector<1x1xi32>
      %282 = arith.select %281, %268, %274 : vector<1x1xi1>, vector<1x1xi32>
      %283 = arith.select %281, %274, %269 : vector<1x1xi1>, vector<1x1xi32>
      %c18_i32 = arith.constant 18 : i32
      %284 = arith.andi %282, %283 : vector<1x1xi32>
      %285 = arith.xori %282, %283 : vector<1x1xi32>
      %c1_i32_72 = arith.constant 1 : i32
      %286 = vector.broadcast %c1_i32_72 : i32 to vector<1x1xi32>
      %287 = arith.shrsi %285, %286 : vector<1x1xi32>
      %288 = arith.addi %284, %287 : vector<1x1xi32>
      %289 = vector.broadcast %288 : vector<1x1xi32> to vector<1x256xi32>
      %290 = arith.cmpi sle, %29, %289 : vector<1x256xi32>
      %291 = arith.extui %290 : vector<1x256xi1> to vector<1x256xi32>
      %cst_73 = arith.constant dense<0> : vector<1xi32>
      %292 = vector.multi_reduction <add>, %291, %cst_73 [1] : vector<1x256xi32> to vector<1xi32>
      %293 = vector.shape_cast %292 : vector<1xi32> to vector<1x1xi32>
      %c98_i32_74 = arith.constant 98 : i32
      %294 = vector.broadcast %c98_i32_74 : i32 to vector<1x1xi32>
      %295 = arith.cmpi sge, %293, %294 : vector<1x1xi32>
      %296 = arith.select %295, %282, %288 : vector<1x1xi1>, vector<1x1xi32>
      %297 = arith.select %295, %288, %283 : vector<1x1xi1>, vector<1x1xi32>
      %c19_i32 = arith.constant 19 : i32
      %298 = arith.andi %296, %297 : vector<1x1xi32>
      %299 = arith.xori %296, %297 : vector<1x1xi32>
      %c1_i32_75 = arith.constant 1 : i32
      %300 = vector.broadcast %c1_i32_75 : i32 to vector<1x1xi32>
      %301 = arith.shrsi %299, %300 : vector<1x1xi32>
      %302 = arith.addi %298, %301 : vector<1x1xi32>
      %303 = vector.broadcast %302 : vector<1x1xi32> to vector<1x256xi32>
      %304 = arith.cmpi sle, %29, %303 : vector<1x256xi32>
      %305 = arith.extui %304 : vector<1x256xi1> to vector<1x256xi32>
      %cst_76 = arith.constant dense<0> : vector<1xi32>
      %306 = vector.multi_reduction <add>, %305, %cst_76 [1] : vector<1x256xi32> to vector<1xi32>
      %307 = vector.shape_cast %306 : vector<1xi32> to vector<1x1xi32>
      %c98_i32_77 = arith.constant 98 : i32
      %308 = vector.broadcast %c98_i32_77 : i32 to vector<1x1xi32>
      %309 = arith.cmpi sge, %307, %308 : vector<1x1xi32>
      %310 = arith.select %309, %296, %302 : vector<1x1xi1>, vector<1x1xi32>
      %311 = arith.select %309, %302, %297 : vector<1x1xi1>, vector<1x1xi32>
      %c20_i32 = arith.constant 20 : i32
      %312 = arith.andi %310, %311 : vector<1x1xi32>
      %313 = arith.xori %310, %311 : vector<1x1xi32>
      %c1_i32_78 = arith.constant 1 : i32
      %314 = vector.broadcast %c1_i32_78 : i32 to vector<1x1xi32>
      %315 = arith.shrsi %313, %314 : vector<1x1xi32>
      %316 = arith.addi %312, %315 : vector<1x1xi32>
      %317 = vector.broadcast %316 : vector<1x1xi32> to vector<1x256xi32>
      %318 = arith.cmpi sle, %29, %317 : vector<1x256xi32>
      %319 = arith.extui %318 : vector<1x256xi1> to vector<1x256xi32>
      %cst_79 = arith.constant dense<0> : vector<1xi32>
      %320 = vector.multi_reduction <add>, %319, %cst_79 [1] : vector<1x256xi32> to vector<1xi32>
      %321 = vector.shape_cast %320 : vector<1xi32> to vector<1x1xi32>
      %c98_i32_80 = arith.constant 98 : i32
      %322 = vector.broadcast %c98_i32_80 : i32 to vector<1x1xi32>
      %323 = arith.cmpi sge, %321, %322 : vector<1x1xi32>
      %324 = arith.select %323, %310, %316 : vector<1x1xi1>, vector<1x1xi32>
      %325 = arith.select %323, %316, %311 : vector<1x1xi1>, vector<1x1xi32>
      %c21_i32 = arith.constant 21 : i32
      %326 = arith.andi %324, %325 : vector<1x1xi32>
      %327 = arith.xori %324, %325 : vector<1x1xi32>
      %c1_i32_81 = arith.constant 1 : i32
      %328 = vector.broadcast %c1_i32_81 : i32 to vector<1x1xi32>
      %329 = arith.shrsi %327, %328 : vector<1x1xi32>
      %330 = arith.addi %326, %329 : vector<1x1xi32>
      %331 = vector.broadcast %330 : vector<1x1xi32> to vector<1x256xi32>
      %332 = arith.cmpi sle, %29, %331 : vector<1x256xi32>
      %333 = arith.extui %332 : vector<1x256xi1> to vector<1x256xi32>
      %cst_82 = arith.constant dense<0> : vector<1xi32>
      %334 = vector.multi_reduction <add>, %333, %cst_82 [1] : vector<1x256xi32> to vector<1xi32>
      %335 = vector.shape_cast %334 : vector<1xi32> to vector<1x1xi32>
      %c98_i32_83 = arith.constant 98 : i32
      %336 = vector.broadcast %c98_i32_83 : i32 to vector<1x1xi32>
      %337 = arith.cmpi sge, %335, %336 : vector<1x1xi32>
      %338 = arith.select %337, %324, %330 : vector<1x1xi1>, vector<1x1xi32>
      %339 = arith.select %337, %330, %325 : vector<1x1xi1>, vector<1x1xi32>
      %c22_i32 = arith.constant 22 : i32
      %340 = arith.andi %338, %339 : vector<1x1xi32>
      %341 = arith.xori %338, %339 : vector<1x1xi32>
      %c1_i32_84 = arith.constant 1 : i32
      %342 = vector.broadcast %c1_i32_84 : i32 to vector<1x1xi32>
      %343 = arith.shrsi %341, %342 : vector<1x1xi32>
      %344 = arith.addi %340, %343 : vector<1x1xi32>
      %345 = vector.broadcast %344 : vector<1x1xi32> to vector<1x256xi32>
      %346 = arith.cmpi sle, %29, %345 : vector<1x256xi32>
      %347 = arith.extui %346 : vector<1x256xi1> to vector<1x256xi32>
      %cst_85 = arith.constant dense<0> : vector<1xi32>
      %348 = vector.multi_reduction <add>, %347, %cst_85 [1] : vector<1x256xi32> to vector<1xi32>
      %349 = vector.shape_cast %348 : vector<1xi32> to vector<1x1xi32>
      %c98_i32_86 = arith.constant 98 : i32
      %350 = vector.broadcast %c98_i32_86 : i32 to vector<1x1xi32>
      %351 = arith.cmpi sge, %349, %350 : vector<1x1xi32>
      %352 = arith.select %351, %338, %344 : vector<1x1xi1>, vector<1x1xi32>
      %353 = arith.select %351, %344, %339 : vector<1x1xi1>, vector<1x1xi32>
      %c23_i32 = arith.constant 23 : i32
      %354 = arith.andi %352, %353 : vector<1x1xi32>
      %355 = arith.xori %352, %353 : vector<1x1xi32>
      %c1_i32_87 = arith.constant 1 : i32
      %356 = vector.broadcast %c1_i32_87 : i32 to vector<1x1xi32>
      %357 = arith.shrsi %355, %356 : vector<1x1xi32>
      %358 = arith.addi %354, %357 : vector<1x1xi32>
      %359 = vector.broadcast %358 : vector<1x1xi32> to vector<1x256xi32>
      %360 = arith.cmpi sle, %29, %359 : vector<1x256xi32>
      %361 = arith.extui %360 : vector<1x256xi1> to vector<1x256xi32>
      %cst_88 = arith.constant dense<0> : vector<1xi32>
      %362 = vector.multi_reduction <add>, %361, %cst_88 [1] : vector<1x256xi32> to vector<1xi32>
      %363 = vector.shape_cast %362 : vector<1xi32> to vector<1x1xi32>
      %c98_i32_89 = arith.constant 98 : i32
      %364 = vector.broadcast %c98_i32_89 : i32 to vector<1x1xi32>
      %365 = arith.cmpi sge, %363, %364 : vector<1x1xi32>
      %366 = arith.select %365, %352, %358 : vector<1x1xi1>, vector<1x1xi32>
      %367 = arith.select %365, %358, %353 : vector<1x1xi1>, vector<1x1xi32>
      %c24_i32 = arith.constant 24 : i32
      %368 = arith.andi %366, %367 : vector<1x1xi32>
      %369 = arith.xori %366, %367 : vector<1x1xi32>
      %c1_i32_90 = arith.constant 1 : i32
      %370 = vector.broadcast %c1_i32_90 : i32 to vector<1x1xi32>
      %371 = arith.shrsi %369, %370 : vector<1x1xi32>
      %372 = arith.addi %368, %371 : vector<1x1xi32>
      %373 = vector.broadcast %372 : vector<1x1xi32> to vector<1x256xi32>
      %374 = arith.cmpi sle, %29, %373 : vector<1x256xi32>
      %375 = arith.extui %374 : vector<1x256xi1> to vector<1x256xi32>
      %cst_91 = arith.constant dense<0> : vector<1xi32>
      %376 = vector.multi_reduction <add>, %375, %cst_91 [1] : vector<1x256xi32> to vector<1xi32>
      %377 = vector.shape_cast %376 : vector<1xi32> to vector<1x1xi32>
      %c98_i32_92 = arith.constant 98 : i32
      %378 = vector.broadcast %c98_i32_92 : i32 to vector<1x1xi32>
      %379 = arith.cmpi sge, %377, %378 : vector<1x1xi32>
      %380 = arith.select %379, %366, %372 : vector<1x1xi1>, vector<1x1xi32>
      %381 = arith.select %379, %372, %367 : vector<1x1xi1>, vector<1x1xi32>
      %c25_i32 = arith.constant 25 : i32
      %382 = arith.andi %380, %381 : vector<1x1xi32>
      %383 = arith.xori %380, %381 : vector<1x1xi32>
      %c1_i32_93 = arith.constant 1 : i32
      %384 = vector.broadcast %c1_i32_93 : i32 to vector<1x1xi32>
      %385 = arith.shrsi %383, %384 : vector<1x1xi32>
      %386 = arith.addi %382, %385 : vector<1x1xi32>
      %387 = vector.broadcast %386 : vector<1x1xi32> to vector<1x256xi32>
      %388 = arith.cmpi sle, %29, %387 : vector<1x256xi32>
      %389 = arith.extui %388 : vector<1x256xi1> to vector<1x256xi32>
      %cst_94 = arith.constant dense<0> : vector<1xi32>
      %390 = vector.multi_reduction <add>, %389, %cst_94 [1] : vector<1x256xi32> to vector<1xi32>
      %391 = vector.shape_cast %390 : vector<1xi32> to vector<1x1xi32>
      %c98_i32_95 = arith.constant 98 : i32
      %392 = vector.broadcast %c98_i32_95 : i32 to vector<1x1xi32>
      %393 = arith.cmpi sge, %391, %392 : vector<1x1xi32>
      %394 = arith.select %393, %380, %386 : vector<1x1xi1>, vector<1x1xi32>
      %395 = arith.select %393, %386, %381 : vector<1x1xi1>, vector<1x1xi32>
      %c26_i32 = arith.constant 26 : i32
      %396 = arith.andi %394, %395 : vector<1x1xi32>
      %397 = arith.xori %394, %395 : vector<1x1xi32>
      %c1_i32_96 = arith.constant 1 : i32
      %398 = vector.broadcast %c1_i32_96 : i32 to vector<1x1xi32>
      %399 = arith.shrsi %397, %398 : vector<1x1xi32>
      %400 = arith.addi %396, %399 : vector<1x1xi32>
      %401 = vector.broadcast %400 : vector<1x1xi32> to vector<1x256xi32>
      %402 = arith.cmpi sle, %29, %401 : vector<1x256xi32>
      %403 = arith.extui %402 : vector<1x256xi1> to vector<1x256xi32>
      %cst_97 = arith.constant dense<0> : vector<1xi32>
      %404 = vector.multi_reduction <add>, %403, %cst_97 [1] : vector<1x256xi32> to vector<1xi32>
      %405 = vector.shape_cast %404 : vector<1xi32> to vector<1x1xi32>
      %c98_i32_98 = arith.constant 98 : i32
      %406 = vector.broadcast %c98_i32_98 : i32 to vector<1x1xi32>
      %407 = arith.cmpi sge, %405, %406 : vector<1x1xi32>
      %408 = arith.select %407, %394, %400 : vector<1x1xi1>, vector<1x1xi32>
      %409 = arith.select %407, %400, %395 : vector<1x1xi1>, vector<1x1xi32>
      %c27_i32 = arith.constant 27 : i32
      %410 = arith.andi %408, %409 : vector<1x1xi32>
      %411 = arith.xori %408, %409 : vector<1x1xi32>
      %c1_i32_99 = arith.constant 1 : i32
      %412 = vector.broadcast %c1_i32_99 : i32 to vector<1x1xi32>
      %413 = arith.shrsi %411, %412 : vector<1x1xi32>
      %414 = arith.addi %410, %413 : vector<1x1xi32>
      %415 = vector.broadcast %414 : vector<1x1xi32> to vector<1x256xi32>
      %416 = arith.cmpi sle, %29, %415 : vector<1x256xi32>
      %417 = arith.extui %416 : vector<1x256xi1> to vector<1x256xi32>
      %cst_100 = arith.constant dense<0> : vector<1xi32>
      %418 = vector.multi_reduction <add>, %417, %cst_100 [1] : vector<1x256xi32> to vector<1xi32>
      %419 = vector.shape_cast %418 : vector<1xi32> to vector<1x1xi32>
      %c98_i32_101 = arith.constant 98 : i32
      %420 = vector.broadcast %c98_i32_101 : i32 to vector<1x1xi32>
      %421 = arith.cmpi sge, %419, %420 : vector<1x1xi32>
      %422 = arith.select %421, %408, %414 : vector<1x1xi1>, vector<1x1xi32>
      %423 = arith.select %421, %414, %409 : vector<1x1xi1>, vector<1x1xi32>
      %c28_i32 = arith.constant 28 : i32
      %424 = arith.andi %422, %423 : vector<1x1xi32>
      %425 = arith.xori %422, %423 : vector<1x1xi32>
      %c1_i32_102 = arith.constant 1 : i32
      %426 = vector.broadcast %c1_i32_102 : i32 to vector<1x1xi32>
      %427 = arith.shrsi %425, %426 : vector<1x1xi32>
      %428 = arith.addi %424, %427 : vector<1x1xi32>
      %429 = vector.broadcast %428 : vector<1x1xi32> to vector<1x256xi32>
      %430 = arith.cmpi sle, %29, %429 : vector<1x256xi32>
      %431 = arith.extui %430 : vector<1x256xi1> to vector<1x256xi32>
      %cst_103 = arith.constant dense<0> : vector<1xi32>
      %432 = vector.multi_reduction <add>, %431, %cst_103 [1] : vector<1x256xi32> to vector<1xi32>
      %433 = vector.shape_cast %432 : vector<1xi32> to vector<1x1xi32>
      %c98_i32_104 = arith.constant 98 : i32
      %434 = vector.broadcast %c98_i32_104 : i32 to vector<1x1xi32>
      %435 = arith.cmpi sge, %433, %434 : vector<1x1xi32>
      %436 = arith.select %435, %422, %428 : vector<1x1xi1>, vector<1x1xi32>
      %437 = arith.select %435, %428, %423 : vector<1x1xi1>, vector<1x1xi32>
      %c29_i32 = arith.constant 29 : i32
      %438 = arith.andi %436, %437 : vector<1x1xi32>
      %439 = arith.xori %436, %437 : vector<1x1xi32>
      %c1_i32_105 = arith.constant 1 : i32
      %440 = vector.broadcast %c1_i32_105 : i32 to vector<1x1xi32>
      %441 = arith.shrsi %439, %440 : vector<1x1xi32>
      %442 = arith.addi %438, %441 : vector<1x1xi32>
      %443 = vector.broadcast %442 : vector<1x1xi32> to vector<1x256xi32>
      %444 = arith.cmpi sle, %29, %443 : vector<1x256xi32>
      %445 = arith.extui %444 : vector<1x256xi1> to vector<1x256xi32>
      %cst_106 = arith.constant dense<0> : vector<1xi32>
      %446 = vector.multi_reduction <add>, %445, %cst_106 [1] : vector<1x256xi32> to vector<1xi32>
      %447 = vector.shape_cast %446 : vector<1xi32> to vector<1x1xi32>
      %c98_i32_107 = arith.constant 98 : i32
      %448 = vector.broadcast %c98_i32_107 : i32 to vector<1x1xi32>
      %449 = arith.cmpi sge, %447, %448 : vector<1x1xi32>
      %450 = arith.select %449, %436, %442 : vector<1x1xi1>, vector<1x1xi32>
      %451 = arith.select %449, %442, %437 : vector<1x1xi1>, vector<1x1xi32>
      %c30_i32 = arith.constant 30 : i32
      %452 = arith.andi %450, %451 : vector<1x1xi32>
      %453 = arith.xori %450, %451 : vector<1x1xi32>
      %c1_i32_108 = arith.constant 1 : i32
      %454 = vector.broadcast %c1_i32_108 : i32 to vector<1x1xi32>
      %455 = arith.shrsi %453, %454 : vector<1x1xi32>
      %456 = arith.addi %452, %455 : vector<1x1xi32>
      %457 = vector.broadcast %456 : vector<1x1xi32> to vector<1x256xi32>
      %458 = arith.cmpi sle, %29, %457 : vector<1x256xi32>
      %459 = arith.extui %458 : vector<1x256xi1> to vector<1x256xi32>
      %cst_109 = arith.constant dense<0> : vector<1xi32>
      %460 = vector.multi_reduction <add>, %459, %cst_109 [1] : vector<1x256xi32> to vector<1xi32>
      %461 = vector.shape_cast %460 : vector<1xi32> to vector<1x1xi32>
      %c98_i32_110 = arith.constant 98 : i32
      %462 = vector.broadcast %c98_i32_110 : i32 to vector<1x1xi32>
      %463 = arith.cmpi sge, %461, %462 : vector<1x1xi32>
      %464 = arith.select %463, %450, %456 : vector<1x1xi1>, vector<1x1xi32>
      %465 = arith.select %463, %456, %451 : vector<1x1xi1>, vector<1x1xi32>
      %c31_i32 = arith.constant 31 : i32
      %466 = arith.andi %464, %465 : vector<1x1xi32>
      %467 = arith.xori %464, %465 : vector<1x1xi32>
      %c1_i32_111 = arith.constant 1 : i32
      %468 = vector.broadcast %c1_i32_111 : i32 to vector<1x1xi32>
      %469 = arith.shrsi %467, %468 : vector<1x1xi32>
      %470 = arith.addi %466, %469 : vector<1x1xi32>
      %471 = vector.broadcast %470 : vector<1x1xi32> to vector<1x256xi32>
      %472 = arith.cmpi sle, %29, %471 : vector<1x256xi32>
      %473 = arith.extui %472 : vector<1x256xi1> to vector<1x256xi32>
      %cst_112 = arith.constant dense<0> : vector<1xi32>
      %474 = vector.multi_reduction <add>, %473, %cst_112 [1] : vector<1x256xi32> to vector<1xi32>
      %475 = vector.shape_cast %474 : vector<1xi32> to vector<1x1xi32>
      %c98_i32_113 = arith.constant 98 : i32
      %476 = vector.broadcast %c98_i32_113 : i32 to vector<1x1xi32>
      %477 = arith.cmpi sge, %475, %476 : vector<1x1xi32>
      %478 = arith.select %477, %464, %470 : vector<1x1xi1>, vector<1x1xi32>
      %479 = arith.select %477, %470, %465 : vector<1x1xi1>, vector<1x1xi32>
      %480 = vector.broadcast %479 : vector<1x1xi32> to vector<1x256xi32>
      %481 = arith.cmpi sgt, %29, %480 : vector<1x256xi32>
      %482 = arith.extui %481 : vector<1x256xi1> to vector<1x256xi32>
      %c0_114 = arith.constant 0 : index
      %c0_115 = arith.constant 0 : index
      %c0_116 = arith.constant 0 : index
      %483 = vector.load %arg4[%c0_114, %c0_115, %c0_116] : memref<1x1x256xi32, #tpu.memory_space<vmem>>, vector<1x1x256xi32>
      %484 = vector.shape_cast %483 : vector<1x1x256xi32> to vector<1x256xi32>
      %485 = vector.shape_cast %482 : vector<1x256xi32> to vector<1x1x256xi32>
      tpu.vector_store %arg4[%c0_114, %c0_115, %c0_116], %485 {strides = array<i32>} : memref<1x1x256xi32, #tpu.memory_space<vmem>>, vector<1x1x256xi32>,
    } else {
    }
    return
  }
  func.func @transform_0(%arg0: i32, %arg1: i32) -> (i32, i32, i32) {
    %c0_i32 = arith.constant 0 : i32
    %c0_i32_0 = arith.constant 0 : i32
    return %arg0, %arg1, %c0_i32 : i32, i32, i32
  }
  func.func @transform_1(%arg0: i32, %arg1: i32) -> (i32, i32, i32) {
    %c0_i32 = arith.constant 0 : i32
    %c0_i32_0 = arith.constant 0 : i32
    return %arg0, %arg1, %c0_i32 : i32, i32, i32
  }
  func.func @transform_2(%arg0: i32, %arg1: i32) -> (i32, i32, i32) {
    %c0_i32 = arith.constant 0 : i32
    %c0_i32_0 = arith.constant 0 : i32
    %c0_i32_1 = arith.constant 0 : i32
    return %arg0, %c0_i32, %c0_i32_0 : i32, i32, i32
  }
}

</mosaic_0001>

<llo_original>
// kernel: tpu_custom_call.1
$region0: #{tpu_custom_call.1}
  #allocation0 [shape = 'u32[]', space=smem, size = 0x4, offset = 0x4, fixed_abs, tag = 'smem constant byte address 0x4 - core index']
  #allocation1 [shape = 'u32[144,128]{1,0:T(1,128)}', space=vmem, size = 0x12000, scoped, tag = 'internal scratch']
  #allocation2 [shape = 'f32[1,256]{1,0:T(1,128)}', space=vmem, size = 0x400, scoped, tag = 'scratch operand']
  %s0 = inlined_call_operand.hbm [shape: f32[2,32,256], index: 0, kind: input, shape index: {}]
  %s1 = inlined_call_operand.hbm [shape: f32[2,32,256], index: 1, kind: input, shape index: {}]
  %s2 = inlined_call_operand.hbm [shape: s32[2,1,256], index: 2, kind: output, shape index: {}]
  %s3 = sld [smem:[#allocation0]]
  $region57: #{tpu_custom_call.1} parent=0
    _
  %s5 = ssub.s32 1, %s3
  %s6 = scalar_select 0, %s5, %s3
  $region1: #{tpu_custom_call.1} parent=0
    #allocation3 [shape = 'u8[65536]{0}', space=vmem, size = 0x10000, scoped, tag = 'input window, operand 0']
    #allocation4 [shape = 's32[2]{0}', space=sflag, size = 0x8, scoped, tag = 'scoped memory for tpu_custom_call.1']
    #allocation5 [shape = 's32[2]{0}', space=sflag, size = 0x8, scoped, tag = 'scoped memory for tpu_custom_call.1']
    #allocation6 [shape = 'u8[65536]{0}', space=vmem, size = 0x10000, scoped, tag = 'input window, operand 1']
    #allocation7 [shape = 's32[2]{0}', space=sflag, size = 0x8, scoped, tag = 'scoped memory for tpu_custom_call.1']
    #allocation8 [shape = 'u8[2048]{0}', space=vmem, size = 0x800, scoped, tag = 'output window, operand 0']
    %7 = vsyncpa [#allocation4], 0
    %s8 = scalar_lea.sflag [#allocation4], 1
    %9 = vsyncpa %s8, 0
    %10 = vsyncpa [#allocation7], 0
    %s11 = scalar_lea.sflag [#allocation7], 1
    %12 = vsyncpa %s11, 0
    %13 = vsyncpa [#allocation5], 0
    %s14 = scalar_lea.sflag [#allocation5], 1
    %15 = vsyncpa %s14, 0
    loop: start=0, step=1, limit=4
    $region2: #{tpu_custom_call.1} parent=1 // loop_pre_header
      _
    $region3: #{tpu_custom_call.1} parent=1 // loop_header
      %s17 = sphi 0, %s21
      %p18 = scmp.ge.s32.totalorder %s17, 4
      %s24 = sphi 0, %s36
      %s25 = sphi 0, %s32
      %s26 = sphi 0, %s24
      %s27 = sphi 0, %s25
      %s28 = sphi 0, %s26
      %s29 = sphi 0, %s27
      %s41 = sphi 0, %s43
      %s44 = sphi 0, %s41
      %s45 = sphi 0, %s44
      %s61 = sphi 0, %s45
      %s69 = sphi 0, %s71
      %s72 = sphi 0, %s69
      %s73 = sphi 0, %s72
      %s89 = sphi 0, %s73
      %s95 = sphi 0, %s97
      %s98 = sphi 0, %s95
      %s99 = sphi 0, %s98
      %s115 = sphi 0, %s99
    $region4: #{tpu_custom_call.1} parent=1 // loop_header_branch
      %20 = sbr.rel (%p18) target = $region8
    $region5: #{tpu_custom_call.1} parent=1 // loop_body
      %s22 = ssub.s32 %s17, 1
      %s23 = ssub.s32 %s17, 2
      %s30 = sadd.s32 1, %s25
      %p31 = scmp.ge.s32.totalorder %s30, 1
      %s32 = scalar_select %p31, 0, %s30
      %s33 = sadd.s32 1, %s24
      %s34 = scalar_select %p31, %s33, %s24
      %p35 = scmp.ge.s32.totalorder %s34, 2
      %s36 = scalar_select %p35, 0, %s34
      %s37 = ssub.s32 %s24, %s36
      %s38 = ssub.s32 %s25, %s32
      %s39 = sor.u32 %s37, %s38
      %p40 = scmp.eq.s32.totalorder %s39, 0
      %s42 = sadd.s32 %s41, 1
      %s43 = scalar_select %p40, %s41, %s42
      %p46 = pneg %p40
      %p47 = scmp.eq.s32.totalorder %s17, 1
      %p48 = por %p46, %p47
      %p49 = scmp.ne.s32.totalorder %s41, %s44
      %p50 = scmp.eq.s32.totalorder %s17, 0
      %p51 = por %p49, %p50
      %p52 = scmp.ne.s32.totalorder %s41, %s44
      %p53 = scmp.eq.s32.totalorder %s22, 1
      %p54 = por %p52, %p53
      %p55 = scmp.ne.s32.totalorder %s44, %s45
      %p56 = scmp.eq.s32.totalorder %s22, 0
      %p57 = por %p55, %p56
      %p58 = scmp.ne.s32.totalorder %s44, %s45
      %p59 = scmp.eq.s32.totalorder %s23, 1
      %p60 = por %p58, %p59
      %p62 = scmp.ne.s32.totalorder %s45, %s61
      %p63 = scmp.eq.s32.totalorder %s23, 0
      %p64 = por %p62, %p63
      %s65 = ssub.s32 %s24, %s36
      %s66 = ssub.s32 %s25, %s32
      %s67 = sor.u32 %s65, %s66
      %p68 = scmp.eq.s32.totalorder %s67, 0
      %s70 = sadd.s32 %s69, 1
      %s71 = scalar_select %p68, %s69, %s70
      %p74 = pneg %p68
      %p75 = scmp.eq.s32.totalorder %s17, 1
      %p76 = por %p74, %p75
      %p77 = scmp.ne.s32.totalorder %s69, %s72
      %p78 = scmp.eq.s32.totalorder %s17, 0
      %p79 = por %p77, %p78
      %p80 = scmp.ne.s32.totalorder %s69, %s72
      %p81 = scmp.eq.s32.totalorder %s22, 1
      %p82 = por %p80, %p81
      %p83 = scmp.ne.s32.totalorder %s72, %s73
      %p84 = scmp.eq.s32.totalorder %s22, 0
      %p85 = por %p83, %p84
      %p86 = scmp.ne.s32.totalorder %s72, %s73
      %p87 = scmp.eq.s32.totalorder %s23, 1
      %p88 = por %p86, %p87
      %p90 = scmp.ne.s32.totalorder %s73, %s89
      %p91 = scmp.eq.s32.totalorder %s23, 0
      %p92 = por %p90, %p91
      %s93 = ssub.s32 %s24, %s36
      %p94 = scmp.eq.s32.totalorder %s93, 0
      %s96 = sadd.s32 %s95, 1
      %s97 = scalar_select %p94, %s95, %s96
      %p100 = pneg %p94
      %p101 = scmp.eq.s32.totalorder %s17, 1
      %p102 = por %p100, %p101
      %p103 = scmp.ne.s32.totalorder %s95, %s98
      %p104 = scmp.eq.s32.totalorder %s17, 0
      %p105 = por %p103, %p104
      %p106 = scmp.ne.s32.totalorder %s95, %s98
      %p107 = scmp.eq.s32.totalorder %s22, 1
      %p108 = por %p106, %p107
      %p109 = scmp.ne.s32.totalorder %s98, %s99
      %p110 = scmp.eq.s32.totalorder %s22, 0
      %p111 = por %p109, %p110
      %p112 = scmp.ne.s32.totalorder %s98, %s99
      %p113 = scmp.eq.s32.totalorder %s23, 1
      %p114 = por %p112, %p113
      %p116 = scmp.ne.s32.totalorder %s99, %s115
      %p117 = scmp.eq.s32.totalorder %s23, 0
      %p118 = por %p116, %p117
      %p119 = scmp.le.s32.totalorder 1, %s17
      %p120 = scmp.lt.s32.totalorder %s17, 3
      %p121 = pnand %p119, %p120
      %p122 = pneg %p121
      // Predicated region
      $region9: #{tpu_custom_call.1} parent=5 // pred_check
        _
      $region10: #{tpu_custom_call.1} parent=5 // pred_check_branch
        %124 = sbr.rel (%p121) target = $region12
      $region11: #{tpu_custom_call.1} parent=5 // pred_region
        %s125 = ssub.s32 %s17, 1
      $region12: #{tpu_custom_call.1} parent=5 // pred_fallthru
        _
      %p126 = scmp.lt.s32.totalorder %s17, 2
      // Predicated region
      $region13: #{tpu_custom_call.1} parent=5 // pred_check
        %p127 = pneg %p126
      $region14: #{tpu_custom_call.1} parent=5 // pred_check_branch
        %129 = sbr.rel (%p127) target = $region16
      $region15: #{tpu_custom_call.1} parent=5 // pred_region
        // Predicated region
        $region17: #{tpu_custom_call.1} parent=15 // pred_check
          %p130 = pneg %p51
        $region18: #{tpu_custom_call.1} parent=15 // pred_check_branch
          %132 = sbr.rel (%p130) target = $region20
        $region19: #{tpu_custom_call.1} parent=15 // pred_region
          %s133 = sand.u32 %s41, 1
          %s134 = scalar_lea.sflag [#allocation4], %s133
          %s135 = sand.u32 %s41, 1
          %s136 = smul.addr %s135, 64
          %s137 = scalar_lea.vmem [#allocation3], %s136
          %s138 = smul.u32 4, %s25
          %s140 = ssub.s32 1024, 1024
          %141 = vsyncadd %s134, %s140
          %s142 = smul.addr %s138, 2
          %s143 = smul.addr %s24, 8
          %s144 = sadd.s32 %s142, %s143
          %s145 = smul.addr %s144, 128
          %s146 = scalar_lea.hbm %s0, %s145
          %s147 = sshll.u32 %s137, 4
          %s148 = int_to_ptr.vmem [resolvable:$true] %s147
          %153 = dma.hbm_to_vmem [thread:$0]  %s146, 1024, %s148, %s134, 256, 256, 16
        $region20: #{tpu_custom_call.1} parent=15 // pred_fallthru
          _
        // Predicated region
        $region21: #{tpu_custom_call.1} parent=15 // pred_check
          %p154 = pneg %p79
        $region22: #{tpu_custom_call.1} parent=15 // pred_check_branch
          %156 = sbr.rel (%p154) target = $region24
        $region23: #{tpu_custom_call.1} parent=15 // pred_region
          %s157 = sand.u32 %s69, 1
          %s158 = scalar_lea.sflag [#allocation7], %s157
          %s159 = sand.u32 %s69, 1
          %s160 = smul.addr %s159, 64
          %s161 = scalar_lea.vmem [#allocation6], %s160
          %s162 = smul.u32 4, %s25
          %s164 = ssub.s32 1024, 1024
          %165 = vsyncadd %s158, %s164
          %s166 = smul.addr %s162, 2
          %s167 = smul.addr %s24, 8
          %s168 = sadd.s32 %s166, %s167
          %s169 = smul.addr %s168, 128
          %s170 = scalar_lea.hbm %s1, %s169
          %s171 = sshll.u32 %s161, 4
          %s172 = int_to_ptr.vmem [resolvable:$true] %s171
          %177 = dma.hbm_to_vmem [thread:$0]  %s170, 1024, %s172, %s158, 256, 256, 16
        $region24: #{tpu_custom_call.1} parent=15 // pred_fallthru
          _
      $region16: #{tpu_custom_call.1} parent=5 // pred_fallthru
        _
      %p178 = scmp.le.s32.totalorder 1, %s17
      %p179 = scmp.lt.s32.totalorder %s17, 3
      %p180 = pnand %p178, %p179
      %p181 = pneg %p180
      // Predicated region
      $region25: #{tpu_custom_call.1} parent=5 // pred_check
        _
      $region26: #{tpu_custom_call.1} parent=5 // pred_check_branch
        %183 = sbr.rel (%p180) target = $region28
      $region27: #{tpu_custom_call.1} parent=5 // pred_region
        %s184 = ssub.s32 %s17, 1
        %s185 = sand.u32 %s44, 1
        %s186 = scalar_lea.sflag [#allocation4], %s185
        %s187 = sand.u32 %s44, 1
        %s188 = smul.addr %s187, 64
        %s189 = scalar_lea.vmem [#allocation3], %s188
        // Predicated region
        $region29: #{tpu_custom_call.1} parent=27 // pred_check
          %p190 = pneg %p57
        $region30: #{tpu_custom_call.1} parent=27 // pred_check_branch
          %192 = sbr.rel (%p190) target = $region32
        $region31: #{tpu_custom_call.1} parent=27 // pred_region
          %193 = dma.done %s186, 1024
        $region32: #{tpu_custom_call.1} parent=27 // pred_fallthru
          _
        %s194 = sand.u32 %s72, 1
        %s195 = scalar_lea.sflag [#allocation7], %s194
        %s196 = sand.u32 %s72, 1
        %s197 = smul.addr %s196, 64
        %s198 = scalar_lea.vmem [#allocation6], %s197
        // Predicated region
        $region33: #{tpu_custom_call.1} parent=27 // pred_check
          %p199 = pneg %p85
        $region34: #{tpu_custom_call.1} parent=27 // pred_check_branch
          %201 = sbr.rel (%p199) target = $region36
        $region35: #{tpu_custom_call.1} parent=27 // pred_region
          %202 = dma.done %s195, 1024
        $region36: #{tpu_custom_call.1} parent=27 // pred_fallthru
          _
        %s203 = sand.u32 %s44, 1
        %s204 = scalar_lea.sflag [#allocation4], %s203
        %s205 = sand.u32 %s44, 1
        %s206 = smul.addr %s205, 64
        %s207 = scalar_lea.vmem [#allocation3], %s206
        %p208 = pneg %p57
        %p209 = pneg %p54
        %s210 = sand.u32 %s72, 1
        %s211 = scalar_lea.sflag [#allocation7], %s210
        %s212 = sand.u32 %s72, 1
        %s213 = smul.addr %s212, 64
        %s214 = scalar_lea.vmem [#allocation6], %s213
        %p215 = pneg %p85
        %p216 = pneg %p82
        %p217 = pneg %p111
        %p218 = pneg %p108
        %s219 = sand.u32 %s98, 1
        %s220 = scalar_lea.sflag [#allocation5], %s219
        %s221 = sand.u32 %s98, 1
        %s222 = smul.addr %s221, 2
        %s223 = scalar_lea.vmem [#allocation8], %s222
        %s224 = smul.u32 4, %s27
        %s225 = smul.u32 4, %s27
        %p226 = scmp.eq.s32.totalorder %s27, 0
        // Predicated region
        $region37: #{tpu_custom_call.1} parent=27 // pred_check
          %p227 = pneg %p226
        $region38: #{tpu_custom_call.1} parent=27 // pred_check_branch
          %229 = sbr.rel (%p227) target = $region40
        $region39: #{tpu_custom_call.1} parent=27 // pred_region
          %v230 = vlaneseq
          %vm231 = vcmp.ge.s32.totalorder %v230, 0
          %vm232 = vcmp.lt.s32.totalorder %v230, 256
          %vm233 = vmand %vm231, %vm232
          %234 = vst.msk [vmem:[#allocation2] sm:$0x3] %vm233, 0.0
        $region40: #{tpu_custom_call.1} parent=27 // pred_fallthru
          _
        %v235 = vld [vmem:[#allocation2] sm:$0x3]
        %v236 = vld [vmem:[%s189] sm:$0xff]
        %v237 = vld [vmem:[%s189 + $0x8] sm:$0xff]
        %v238 = vld [vmem:[%s189 + $0x10] sm:$0xff]
        %v239 = vld [vmem:[%s189 + $0x18] sm:$0xff]
        %v240 = vld [vmem:[%s189 + $0x20] sm:$0xff]
        %v241 = vld [vmem:[%s189 + $0x28] sm:$0xff]
        %v242 = vld [vmem:[%s189 + $0x30] sm:$0xff]
        %v243 = vld [vmem:[%s189 + $0x38] sm:$0xff]
        %v244 = vld [vmem:[%s198] sm:$0xff]
        %v245 = vld [vmem:[%s198 + $0x8] sm:$0xff]
        %v246 = vld [vmem:[%s198 + $0x10] sm:$0xff]
        %v247 = vld [vmem:[%s198 + $0x18] sm:$0xff]
        %v248 = vld [vmem:[%s198 + $0x20] sm:$0xff]
        %v249 = vld [vmem:[%s198 + $0x28] sm:$0xff]
        %v250 = vld [vmem:[%s198 + $0x30] sm:$0xff]
        %v251 = vld [vmem:[%s198 + $0x38] sm:$0xff]
        %v252 = vadd.f32 %v236, %v244
        %v253 = vadd.f32 %v237, %v245
        %v254 = vadd.f32 %v238, %v246
        %v255 = vadd.f32 %v239, %v247
        %v256 = vadd.f32 %v240, %v248
        %v257 = vadd.f32 %v241, %v249
        %v258 = vadd.f32 %v242, %v250
        %v259 = vadd.f32 %v243, %v251
        %v260 = vadd.f32 %v252, %v254
        %v261 = vadd.f32 %v260, %v256
        %v262 = vadd.f32 %v261, %v258
        %v263 = vrot.slane %v262, 4
        %v264 = vadd.f32 %v262, %v263
        %v265 = vrot.slane %v264, 2
        %v266 = vadd.f32 %v264, %v265
        %v267 = vrot.slane %v266, 1
        %v268 = vadd.f32 %v266, %v267
        %v269 = vadd.f32 %v253, %v255
        %v270 = vadd.f32 %v269, %v257
        %v271 = vadd.f32 %v270, %v259
        %v272 = vrot.slane %v271, 4
        %v273 = vadd.f32 %v271, %v272
        %v274 = vrot.slane %v273, 2
        %v275 = vadd.f32 %v273, %v274
        %v276 = vrot.slane %v275, 1
        %v277 = vadd.f32 %v275, %v276
        %v280 = vcombine.low %v268, %v277
        %v282 = vunpack.c.l.s4 1966171168
        %v283 = vunpack.c.0.s8 %v282
        %v284 = vlaneseq
        %v285 = vshrl.u32 %v284, 7
        %v286 = vsub.s32 %v283, %v285
        %v287 = vrot.slane %v280, %v286
        %v289 = vunpack.c.l.s4 1966171168
        %v290 = vunpack.c.0.s8 %v289
        %v291 = vlaneseq
        %v292 = vshrl.u32 %v291, 7
        %v293 = vsub.s32 %v290, %v292
        %v294 = vrot.slane %v287, %v293
        %v296 = vadd.f32 %v235, %v294
        %v297 = vlaneseq
        %vm298 = vcmp.ge.s32.totalorder %v297, 0
        %vm299 = vcmp.lt.s32.totalorder %v297, 256
        %vm300 = vmand %vm298, %vm299
        %301 = vst.msk [vmem:[#allocation2] sm:$0x3] %vm300, %v296
        // Predicated region
        $region41: #{tpu_custom_call.1} parent=27 // pred_check
          %p302 = pneg %p226
        $region42: #{tpu_custom_call.1} parent=27 // pred_check_branch
          %304 = sbr.rel (%p302) target = $region44
        $region43: #{tpu_custom_call.1} parent=27 // pred_region
          %v305 = vld [vmem:[#allocation2] sm:$0x3]
          %v306 = vmul.f32 %v305, 0.03125
          %v308 = vlaneseq
          %v309 = vshrl.u32 %v308, 7
          %v310 = vsub.s32 0, %v309
          %v311 = vrot.slane %v306, %v310
          %v312 = vlaneseq
          %v313 = vshrl.u32 %v312, 7
          %v314 = vsub.s32 1, %v313
          %v315 = vrot.slane %v306, %v314
          %vm316 = vcmp.lt.s32.totalorder %v311, 0
          %vm317 = vcmp.lt.s32.totalorder %v315, 0
          %v318 = vsub.s32 2147483648, %v311
          %v319 = vsub.s32 2147483648, %v315
          %v320 = vsel %vm316, %v318, %v311
          %v321 = vsel %vm317, %v319, %v315
          %v322 = vlaneseq
          %v323 = vand.u32 %v322, 127
          %v324 = vadd.s32 %v323, 128
          %vm325 = vcmp.lt.s32.totalorder %v323, 196
          %vm326 = vcmp.lt.s32.totalorder %v324, 196
          %v327 = vsel %vm325, %v320, 2147483647
          %v328 = vsel %vm326, %v321, 2147483647
          %vm329 = vcmp.le.s32.totalorder %v327, 4294967295
          %vm330 = vcmp.le.s32.totalorder %v328, 4294967295
          %v331 = vsel %vm329, 1, 0
          %v332 = vsel %vm330, 1, 0
          %vm333 = vcmask 1040384
          %v334 = vsel %vm333, %v331, 0
          %v335 = vsel %vm333, %v332, 0
          %v336 = vadd.s32 %v334, %v335
          %v337 = vand.u32 %v336, 65535
          %v338 = vshrl.u32 %v336, 16
          %v339 = vcvt.s32.f32 %v337
          %v340 = vcvt.s32.f32 %v338
          %341 = vadd.xlane.f32.xlu0 %v339
          %v342 = vpop.xlane.xlu0 %341
          %343 = vadd.xlane.f32.xlu0 %v340
          %v344 = vpop.xlane.xlu0 %343
          %v345 = vcvt.f32.s32 %v342
          %v346 = vcvt.f32.s32 %v344
          %v347 = vshll.u32 %v346, 16
          %v348 = vadd.s32 %v347, %v345
          %vm349 = vcmp.ge.s32.totalorder %v348, 98
          %v350 = vsel %vm349, 2147483648, 4294967295
          %v351 = vsel %vm349, 4294967295, 2147483647
          %v352 = vand.u32 %v350, %v351
          %v353 = vxor.u32 %v350, %v351
          %v354 = vshra.s32 %v353, 1
          %v355 = vadd.s32 %v352, %v354
          %vm356 = vcmp.le.s32.totalorder %v327, %v355
          %vm357 = vcmp.le.s32.totalorder %v328, %v355
          %v358 = vsel %vm356, 1, 0
          %v359 = vsel %vm357, 1, 0
          %v360 = vsel %vm333, %v358, 0
          %v361 = vsel %vm333, %v359, 0
          %v362 = vadd.s32 %v360, %v361
          %v363 = vand.u32 %v362, 65535
          %v364 = vshrl.u32 %v362, 16
          %v365 = vcvt.s32.f32 %v363
          %v366 = vcvt.s32.f32 %v364
          %367 = vadd.xlane.f32.xlu0 %v365
          %v368 = vpop.xlane.xlu0 %367
          %369 = vadd.xlane.f32.xlu0 %v366
          %v370 = vpop.xlane.xlu0 %369
          %v371 = vcvt.f32.s32 %v368
          %v372 = vcvt.f32.s32 %v370
          %v373 = vshll.u32 %v372, 16
          %v374 = vadd.s32 %v373, %v371
          %vm375 = vcmp.ge.s32.totalorder %v374, 98
          %v376 = vsel %vm375, %v350, %v355
          %v377 = vsel %vm375, %v355, %v351
          %v378 = vand.u32 %v376, %v377
          %v379 = vxor.u32 %v376, %v377
          %v380 = vshra.s32 %v379, 1
          %v381 = vadd.s32 %v378, %v380
          %vm382 = vcmp.le.s32.totalorder %v327, %v381
          %vm383 = vcmp.le.s32.totalorder %v328, %v381
          %v384 = vsel %vm382, 1, 0
          %v385 = vsel %vm383, 1, 0
          %v386 = vsel %vm333, %v384, 0
          %v387 = vsel %vm333, %v385, 0
          %v388 = vadd.s32 %v386, %v387
          %v389 = vand.u32 %v388, 65535
          %v390 = vshrl.u32 %v388, 16
          %v391 = vcvt.s32.f32 %v389
          %v392 = vcvt.s32.f32 %v390
          %393 = vadd.xlane.f32.xlu0 %v391
          %v394 = vpop.xlane.xlu0 %393
          %395 = vadd.xlane.f32.xlu0 %v392
          %v396 = vpop.xlane.xlu0 %395
          %v397 = vcvt.f32.s32 %v394
          %v398 = vcvt.f32.s32 %v396
          %v399 = vshll.u32 %v398, 16
          %v400 = vadd.s32 %v399, %v397
          %vm401 = vcmp.ge.s32.totalorder %v400, 98
          %v402 = vsel %vm401, %v376, %v381
          %v403 = vsel %vm401, %v381, %v377
          %v404 = vand.u32 %v402, %v403
          %v405 = vxor.u32 %v402, %v403
          %v406 = vshra.s32 %v405, 1
          %v407 = vadd.s32 %v404, %v406
          %vm408 = vcmp.le.s32.totalorder %v327, %v407
          %vm409 = vcmp.le.s32.totalorder %v328, %v407
          %v410 = vsel %vm408, 1, 0
          %v411 = vsel %vm409, 1, 0
          %v412 = vsel %vm333, %v410, 0
          %v413 = vsel %vm333, %v411, 0
          %v414 = vadd.s32 %v412, %v413
          %v415 = vand.u32 %v414, 65535
          %v416 = vshrl.u32 %v414, 16
          %v417 = vcvt.s32.f32 %v415
          %v418 = vcvt.s32.f32 %v416
          %419 = vadd.xlane.f32.xlu0 %v417
          %v420 = vpop.xlane.xlu0 %419
          %421 = vadd.xlane.f32.xlu0 %v418
          %v422 = vpop.xlane.xlu0 %421
          %v423 = vcvt.f32.s32 %v420
          %v424 = vcvt.f32.s32 %v422
          %v425 = vshll.u32 %v424, 16
          %v426 = vadd.s32 %v425, %v423
          %vm427 = vcmp.ge.s32.totalorder %v426, 98
          %v428 = vsel %vm427, %v402, %v407
          %v429 = vsel %vm427, %v407, %v403
          %v430 = vand.u32 %v428, %v429
          %v431 = vxor.u32 %v428, %v429
          %v432 = vshra.s32 %v431, 1
          %v433 = vadd.s32 %v430, %v432
          %vm434 = vcmp.le.s32.totalorder %v327, %v433
          %vm435 = vcmp.le.s32.totalorder %v328, %v433
          %v436 = vsel %vm434, 1, 0
          %v437 = vsel %vm435, 1, 0
          %v438 = vsel %vm333, %v436, 0
          %v439 = vsel %vm333, %v437, 0
          %v440 = vadd.s32 %v438, %v439
          %v441 = vand.u32 %v440, 65535
          %v442 = vshrl.u32 %v440, 16
          %v443 = vcvt.s32.f32 %v441
          %v444 = vcvt.s32.f32 %v442
          %445 = vadd.xlane.f32.xlu0 %v443
          %v446 = vpop.xlane.xlu0 %445
          %447 = vadd.xlane.f32.xlu0 %v444
          %v448 = vpop.xlane.xlu0 %447
          %v449 = vcvt.f32.s32 %v446
          %v450 = vcvt.f32.s32 %v448
          %v451 = vshll.u32 %v450, 16
          %v452 = vadd.s32 %v451, %v449
          %vm453 = vcmp.ge.s32.totalorder %v452, 98
          %v454 = vsel %vm453, %v428, %v433
          %v455 = vsel %vm453, %v433, %v429
          %v456 = vand.u32 %v454, %v455
          %v457 = vxor.u32 %v454, %v455
          %v458 = vshra.s32 %v457, 1
          %v459 = vadd.s32 %v456, %v458
          %vm460 = vcmp.le.s32.totalorder %v327, %v459
          %vm461 = vcmp.le.s32.totalorder %v328, %v459
          %v462 = vsel %vm460, 1, 0
          %v463 = vsel %vm461, 1, 0
          %v464 = vsel %vm333, %v462, 0
          %v465 = vsel %vm333, %v463, 0
          %v466 = vadd.s32 %v464, %v465
          %v467 = vand.u32 %v466, 65535
          %v468 = vshrl.u32 %v466, 16
          %v469 = vcvt.s32.f32 %v467
          %v470 = vcvt.s32.f32 %v468
          %471 = vadd.xlane.f32.xlu0 %v469
          %v472 = vpop.xlane.xlu0 %471
          %473 = vadd.xlane.f32.xlu0 %v470
          %v474 = vpop.xlane.xlu0 %473
          %v475 = vcvt.f32.s32 %v472
          %v476 = vcvt.f32.s32 %v474
          %v477 = vshll.u32 %v476, 16
          %v478 = vadd.s32 %v477, %v475
          %vm479 = vcmp.ge.s32.totalorder %v478, 98
          %v480 = vsel %vm479, %v454, %v459
          %v481 = vsel %vm479, %v459, %v455
          %v482 = vand.u32 %v480, %v481
          %v483 = vxor.u32 %v480, %v481
          %v484 = vshra.s32 %v483, 1
          %v485 = vadd.s32 %v482, %v484
          %vm486 = vcmp.le.s32.totalorder %v327, %v485
          %vm487 = vcmp.le.s32.totalorder %v328, %v485
          %v488 = vsel %vm486, 1, 0
          %v489 = vsel %vm487, 1, 0
          %v490 = vsel %vm333, %v488, 0
          %v491 = vsel %vm333, %v489, 0
          %v492 = vadd.s32 %v490, %v491
          %v493 = vand.u32 %v492, 65535
          %v494 = vshrl.u32 %v492, 16
          %v495 = vcvt.s32.f32 %v493
          %v496 = vcvt.s32.f32 %v494
          %497 = vadd.xlane.f32.xlu0 %v495
          %v498 = vpop.xlane.xlu0 %497
          %499 = vadd.xlane.f32.xlu0 %v496
          %v500 = vpop.xlane.xlu0 %499
          %v501 = vcvt.f32.s32 %v498
          %v502 = vcvt.f32.s32 %v500
          %v503 = vshll.u32 %v502, 16
          %v504 = vadd.s32 %v503, %v501
          %vm505 = vcmp.ge.s32.totalorder %v504, 98
          %v506 = vsel %vm505, %v480, %v485
          %v507 = vsel %vm505, %v485, %v481
          %v508 = vand.u32 %v506, %v507
          %v509 = vxor.u32 %v506, %v507
          %v510 = vshra.s32 %v509, 1
          %v511 = vadd.s32 %v508, %v510
          %vm512 = vcmp.le.s32.totalorder %v327, %v511
          %vm513 = vcmp.le.s32.totalorder %v328, %v511
          %v514 = vsel %vm512, 1, 0
          %v515 = vsel %vm513, 1, 0
          %v516 = vsel %vm333, %v514, 0
          %v517 = vsel %vm333, %v515, 0
          %v518 = vadd.s32 %v516, %v517
          %v519 = vand.u32 %v518, 65535
          %v520 = vshrl.u32 %v518, 16
          %v521 = vcvt.s32.f32 %v519
          %v522 = vcvt.s32.f32 %v520
          %523 = vadd.xlane.f32.xlu0 %v521
          %v524 = vpop.xlane.xlu0 %523
          %525 = vadd.xlane.f32.xlu0 %v522
          %v526 = vpop.xlane.xlu0 %525
          %v527 = vcvt.f32.s32 %v524
          %v528 = vcvt.f32.s32 %v526
          %v529 = vshll.u32 %v528, 16
          %v530 = vadd.s32 %v529, %v527
          %vm531 = vcmp.ge.s32.totalorder %v530, 98
          %v532 = vsel %vm531, %v506, %v511
          %v533 = vsel %vm531, %v511, %v507
          %v534 = vand.u32 %v532, %v533
          %v535 = vxor.u32 %v532, %v533
          %v536 = vshra.s32 %v535, 1
          %v537 = vadd.s32 %v534, %v536
          %vm538 = vcmp.le.s32.totalorder %v327, %v537
          %vm539 = vcmp.le.s32.totalorder %v328, %v537
          %v540 = vsel %vm538, 1, 0
          %v541 = vsel %vm539, 1, 0
          %v542 = vsel %vm333, %v540, 0
          %v543 = vsel %vm333, %v541, 0
          %v544 = vadd.s32 %v542, %v543
          %v545 = vand.u32 %v544, 65535
          %v546 = vshrl.u32 %v544, 16
          %v547 = vcvt.s32.f32 %v545
          %v548 = vcvt.s32.f32 %v546
          %549 = vadd.xlane.f32.xlu0 %v547
          %v550 = vpop.xlane.xlu0 %549
          %551 = vadd.xlane.f32.xlu0 %v548
          %v552 = vpop.xlane.xlu0 %551
          %v553 = vcvt.f32.s32 %v550
          %v554 = vcvt.f32.s32 %v552
          %v555 = vshll.u32 %v554, 16
          %v556 = vadd.s32 %v555, %v553
          %vm557 = vcmp.ge.s32.totalorder %v556, 98
          %v558 = vsel %vm557, %v532, %v537
          %v559 = vsel %vm557, %v537, %v533
          %v560 = vand.u32 %v558, %v559
          %v561 = vxor.u32 %v558, %v559
          %v562 = vshra.s32 %v561, 1
          %v563 = vadd.s32 %v560, %v562
          %vm564 = vcmp.le.s32.totalorder %v327, %v563
          %vm565 = vcmp.le.s32.totalorder %v328, %v563
          %v566 = vsel %vm564, 1, 0
          %v567 = vsel %vm565, 1, 0
          %v568 = vsel %vm333, %v566, 0
          %v569 = vsel %vm333, %v567, 0
          %v570 = vadd.s32 %v568, %v569
          %v571 = vand.u32 %v570, 65535
          %v572 = vshrl.u32 %v570, 16
          %v573 = vcvt.s32.f32 %v571
          %v574 = vcvt.s32.f32 %v572
          %575 = vadd.xlane.f32.xlu0 %v573
          %v576 = vpop.xlane.xlu0 %575
          %577 = vadd.xlane.f32.xlu0 %v574
          %v578 = vpop.xlane.xlu0 %577
          %v579 = vcvt.f32.s32 %v576
          %v580 = vcvt.f32.s32 %v578
          %v581 = vshll.u32 %v580, 16
          %v582 = vadd.s32 %v581, %v579
          %vm583 = vcmp.ge.s32.totalorder %v582, 98
          %v584 = vsel %vm583, %v558, %v563
          %v585 = vsel %vm583, %v563, %v559
          %v586 = vand.u32 %v584, %v585
          %v587 = vxor.u32 %v584, %v585
          %v588 = vshra.s32 %v587, 1
          %v589 = vadd.s32 %v586, %v588
          %vm590 = vcmp.le.s32.totalorder %v327, %v589
          %vm591 = vcmp.le.s32.totalorder %v328, %v589
          %v592 = vsel %vm590, 1, 0
          %v593 = vsel %vm591, 1, 0
          %v594 = vsel %vm333, %v592, 0
          %v595 = vsel %vm333, %v593, 0
          %v596 = vadd.s32 %v594, %v595
          %v597 = vand.u32 %v596, 65535
          %v598 = vshrl.u32 %v596, 16
          %v599 = vcvt.s32.f32 %v597
          %v600 = vcvt.s32.f32 %v598
          %601 = vadd.xlane.f32.xlu0 %v599
          %v602 = vpop.xlane.xlu0 %601
          %603 = vadd.xlane.f32.xlu0 %v600
          %v604 = vpop.xlane.xlu0 %603
          %v605 = vcvt.f32.s32 %v602
          %v606 = vcvt.f32.s32 %v604
          %v607 = vshll.u32 %v606, 16
          %v608 = vadd.s32 %v607, %v605
          %vm609 = vcmp.ge.s32.totalorder %v608, 98
          %v610 = vsel %vm609, %v584, %v589
          %v611 = vsel %vm609, %v589, %v585
          %v612 = vand.u32 %v610, %v611
          %v613 = vxor.u32 %v610, %v611
          %v614 = vshra.s32 %v613, 1
          %v615 = vadd.s32 %v612, %v614
          %vm616 = vcmp.le.s32.totalorder %v327, %v615
          %vm617 = vcmp.le.s32.totalorder %v328, %v615
          %v618 = vsel %vm616, 1, 0
          %v619 = vsel %vm617, 1, 0
          %v620 = vsel %vm333, %v618, 0
          %v621 = vsel %vm333, %v619, 0
          %v622 = vadd.s32 %v620, %v621
          %v623 = vand.u32 %v622, 65535
          %v624 = vshrl.u32 %v622, 16
          %v625 = vcvt.s32.f32 %v623
          %v626 = vcvt.s32.f32 %v624
          %627 = vadd.xlane.f32.xlu0 %v625
          %v628 = vpop.xlane.xlu0 %627
          %629 = vadd.xlane.f32.xlu0 %v626
          %v630 = vpop.xlane.xlu0 %629
          %v631 = vcvt.f32.s32 %v628
          %v632 = vcvt.f32.s32 %v630
          %v633 = vshll.u32 %v632, 16
          %v634 = vadd.s32 %v633, %v631
          %vm635 = vcmp.ge.s32.totalorder %v634, 98
          %v636 = vsel %vm635, %v610, %v615
          %v637 = vsel %vm635, %v615, %v611
          %v638 = vand.u32 %v636, %v637
          %v639 = vxor.u32 %v636, %v637
          %v640 = vshra.s32 %v639, 1
          %v641 = vadd.s32 %v638, %v640
          %vm642 = vcmp.le.s32.totalorder %v327, %v641
          %vm643 = vcmp.le.s32.totalorder %v328, %v641
          %v644 = vsel %vm642, 1, 0
          %v645 = vsel %vm643, 1, 0
          %v646 = vsel %vm333, %v644, 0
          %v647 = vsel %vm333, %v645, 0
          %v648 = vadd.s32 %v646, %v647
          %v649 = vand.u32 %v648, 65535
          %v650 = vshrl.u32 %v648, 16
          %v651 = vcvt.s32.f32 %v649
          %v652 = vcvt.s32.f32 %v650
          %653 = vadd.xlane.f32.xlu0 %v651
          %v654 = vpop.xlane.xlu0 %653
          %655 = vadd.xlane.f32.xlu0 %v652
          %v656 = vpop.xlane.xlu0 %655
          %v657 = vcvt.f32.s32 %v654
          %v658 = vcvt.f32.s32 %v656
          %v659 = vshll.u32 %v658, 16
          %v660 = vadd.s32 %v659, %v657
          %vm661 = vcmp.ge.s32.totalorder %v660, 98
          %v662 = vsel %vm661, %v636, %v641
          %v663 = vsel %vm661, %v641, %v637
          %v664 = vand.u32 %v662, %v663
          %v665 = vxor.u32 %v662, %v663
          %v666 = vshra.s32 %v665, 1
          %v667 = vadd.s32 %v664, %v666
          %vm668 = vcmp.le.s32.totalorder %v327, %v667
          %vm669 = vcmp.le.s32.totalorder %v328, %v667
          %v670 = vsel %vm668, 1, 0
          %v671 = vsel %vm669, 1, 0
          %v672 = vsel %vm333, %v670, 0
          %v673 = vsel %vm333, %v671, 0
          %v674 = vadd.s32 %v672, %v673
          %v675 = vand.u32 %v674, 65535
          %v676 = vshrl.u32 %v674, 16
          %v677 = vcvt.s32.f32 %v675
          %v678 = vcvt.s32.f32 %v676
          %679 = vadd.xlane.f32.xlu0 %v677
          %v680 = vpop.xlane.xlu0 %679
          %681 = vadd.xlane.f32.xlu0 %v678
          %v682 = vpop.xlane.xlu0 %681
          %v683 = vcvt.f32.s32 %v680
          %v684 = vcvt.f32.s32 %v682
          %v685 = vshll.u32 %v684, 16
          %v686 = vadd.s32 %v685, %v683
          %vm687 = vcmp.ge.s32.totalorder %v686, 98
          %v688 = vsel %vm687, %v662, %v667
          %v689 = vsel %vm687, %v667, %v663
          %v690 = vand.u32 %v688, %v689
          %v691 = vxor.u32 %v688, %v689
          %v692 = vshra.s32 %v691, 1
          %v693 = vadd.s32 %v690, %v692
          %vm694 = vcmp.le.s32.totalorder %v327, %v693
          %vm695 = vcmp.le.s32.totalorder %v328, %v693
          %v696 = vsel %vm694, 1, 0
          %v697 = vsel %vm695, 1, 0
          %v698 = vsel %vm333, %v696, 0
          %v699 = vsel %vm333, %v697, 0
          %v700 = vadd.s32 %v698, %v699
          %v701 = vand.u32 %v700, 65535
          %v702 = vshrl.u32 %v700, 16
          %v703 = vcvt.s32.f32 %v701
          %v704 = vcvt.s32.f32 %v702
          %705 = vadd.xlane.f32.xlu0 %v703
          %v706 = vpop.xlane.xlu0 %705
          %707 = vadd.xlane.f32.xlu0 %v704
          %v708 = vpop.xlane.xlu0 %707
          %v709 = vcvt.f32.s32 %v706
          %v710 = vcvt.f32.s32 %v708
          %v711 = vshll.u32 %v710, 16
          %v712 = vadd.s32 %v711, %v709
          %vm713 = vcmp.ge.s32.totalorder %v712, 98
          %v714 = vsel %vm713, %v688, %v693
          %v715 = vsel %vm713, %v693, %v689
          %v716 = vand.u32 %v714, %v715
          %v717 = vxor.u32 %v714, %v715
          %v718 = vshra.s32 %v717, 1
          %v719 = vadd.s32 %v716, %v718
          %vm720 = vcmp.le.s32.totalorder %v327, %v719
          %vm721 = vcmp.le.s32.totalorder %v328, %v719
          %v722 = vsel %vm720, 1, 0
          %v723 = vsel %vm721, 1, 0
          %v724 = vsel %vm333, %v722, 0
          %v725 = vsel %vm333, %v723, 0
          %v726 = vadd.s32 %v724, %v725
          %v727 = vand.u32 %v726, 65535
          %v728 = vshrl.u32 %v726, 16
          %v729 = vcvt.s32.f32 %v727
          %v730 = vcvt.s32.f32 %v728
          %731 = vadd.xlane.f32.xlu0 %v729
          %v732 = vpop.xlane.xlu0 %731
          %733 = vadd.xlane.f32.xlu0 %v730
          %v734 = vpop.xlane.xlu0 %733
          %v735 = vcvt.f32.s32 %v732
          %v736 = vcvt.f32.s32 %v734
          %v737 = vshll.u32 %v736, 16
          %v738 = vadd.s32 %v737, %v735
          %vm739 = vcmp.ge.s32.totalorder %v738, 98
          %v740 = vsel %vm739, %v714, %v719
          %v741 = vsel %vm739, %v719, %v715
          %v742 = vand.u32 %v740, %v741
          %v743 = vxor.u32 %v740, %v741
          %v744 = vshra.s32 %v743, 1
          %v745 = vadd.s32 %v742, %v744
          %vm746 = vcmp.le.s32.totalorder %v327, %v745
          %vm747 = vcmp.le.s32.totalorder %v328, %v745
          %v748 = vsel %vm746, 1, 0
          %v749 = vsel %vm747, 1, 0
          %v750 = vsel %vm333, %v748, 0
          %v751 = vsel %vm333, %v749, 0
          %v752 = vadd.s32 %v750, %v751
          %v753 = vand.u32 %v752, 65535
          %v754 = vshrl.u32 %v752, 16
          %v755 = vcvt.s32.f32 %v753
          %v756 = vcvt.s32.f32 %v754
          %757 = vadd.xlane.f32.xlu0 %v755
          %v758 = vpop.xlane.xlu0 %757
          %759 = vadd.xlane.f32.xlu0 %v756
          %v760 = vpop.xlane.xlu0 %759
          %v761 = vcvt.f32.s32 %v758
          %v762 = vcvt.f32.s32 %v760
          %v763 = vshll.u32 %v762, 16
          %v764 = vadd.s32 %v763, %v761
          %vm765 = vcmp.ge.s32.totalorder %v764, 98
          %v766 = vsel %vm765, %v740, %v745
          %v767 = vsel %vm765, %v745, %v741
          %v768 = vand.u32 %v766, %v767
          %v769 = vxor.u32 %v766, %v767
          %v770 = vshra.s32 %v769, 1
          %v771 = vadd.s32 %v768, %v770
          %vm772 = vcmp.le.s32.totalorder %v327, %v771
          %vm773 = vcmp.le.s32.totalorder %v328, %v771
          %v774 = vsel %vm772, 1, 0
          %v775 = vsel %vm773, 1, 0
          %v776 = vsel %vm333, %v774, 0
          %v777 = vsel %vm333, %v775, 0
          %v778 = vadd.s32 %v776, %v777
          %v779 = vand.u32 %v778, 65535
          %v780 = vshrl.u32 %v778, 16
          %v781 = vcvt.s32.f32 %v779
          %v782 = vcvt.s32.f32 %v780
          %783 = vadd.xlane.f32.xlu0 %v781
          %v784 = vpop.xlane.xlu0 %783
          %785 = vadd.xlane.f32.xlu0 %v782
          %v786 = vpop.xlane.xlu0 %785
          %v787 = vcvt.f32.s32 %v784
          %v788 = vcvt.f32.s32 %v786
          %v789 = vshll.u32 %v788, 16
          %v790 = vadd.s32 %v789, %v787
          %vm791 = vcmp.ge.s32.totalorder %v790, 98
          %v792 = vsel %vm791, %v766, %v771
          %v793 = vsel %vm791, %v771, %v767
          %v794 = vand.u32 %v792, %v793
          %v795 = vxor.u32 %v792, %v793
          %v796 = vshra.s32 %v795, 1
          %v797 = vadd.s32 %v794, %v796
          %vm798 = vcmp.le.s32.totalorder %v327, %v797
          %vm799 = vcmp.le.s32.totalorder %v328, %v797
          %v800 = vsel %vm798, 1, 0
          %v801 = vsel %vm799, 1, 0
          %v802 = vsel %vm333, %v800, 0
          %v803 = vsel %vm333, %v801, 0
          %v804 = vadd.s32 %v802, %v803
          %v805 = vand.u32 %v804, 65535
          %v806 = vshrl.u32 %v804, 16
          %v807 = vcvt.s32.f32 %v805
          %v808 = vcvt.s32.f32 %v806
          %809 = vadd.xlane.f32.xlu0 %v807
          %v810 = vpop.xlane.xlu0 %809
          %811 = vadd.xlane.f32.xlu0 %v808
          %v812 = vpop.xlane.xlu0 %811
          %v813 = vcvt.f32.s32 %v810
          %v814 = vcvt.f32.s32 %v812
          %v815 = vshll.u32 %v814, 16
          %v816 = vadd.s32 %v815, %v813
          %vm817 = vcmp.ge.s32.totalorder %v816, 98
          %v818 = vsel %vm817, %v792, %v797
          %v819 = vsel %vm817, %v797, %v793
          %v820 = vand.u32 %v818, %v819
          %v821 = vxor.u32 %v818, %v819
          %v822 = vshra.s32 %v821, 1
          %v823 = vadd.s32 %v820, %v822
          %vm824 = vcmp.le.s32.totalorder %v327, %v823
          %vm825 = vcmp.le.s32.totalorder %v328, %v823
          %v826 = vsel %vm824, 1, 0
          %v827 = vsel %vm825, 1, 0
          %v828 = vsel %vm333, %v826, 0
          %v829 = vsel %vm333, %v827, 0
          %v830 = vadd.s32 %v828, %v829
          %v831 = vand.u32 %v830, 65535
          %v832 = vshrl.u32 %v830, 16
          %v833 = vcvt.s32.f32 %v831
          %v834 = vcvt.s32.f32 %v832
          %835 = vadd.xlane.f32.xlu0 %v833
          %v836 = vpop.xlane.xlu0 %835
          %837 = vadd.xlane.f32.xlu0 %v834
          %v838 = vpop.xlane.xlu0 %837
          %v839 = vcvt.f32.s32 %v836
          %v840 = vcvt.f32.s32 %v838
          %v841 = vshll.u32 %v840, 16
          %v842 = vadd.s32 %v841, %v839
          %vm843 = vcmp.ge.s32.totalorder %v842, 98
          %v844 = vsel %vm843, %v818, %v823
          %v845 = vsel %vm843, %v823, %v819
          %v846 = vand.u32 %v844, %v845
          %v847 = vxor.u32 %v844, %v845
          %v848 = vshra.s32 %v847, 1
          %v849 = vadd.s32 %v846, %v848
          %vm850 = vcmp.le.s32.totalorder %v327, %v849
          %vm851 = vcmp.le.s32.totalorder %v328, %v849
          %v852 = vsel %vm850, 1, 0
          %v853 = vsel %vm851, 1, 0
          %v854 = vsel %vm333, %v852, 0
          %v855 = vsel %vm333, %v853, 0
          %v856 = vadd.s32 %v854, %v855
          %v857 = vand.u32 %v856, 65535
          %v858 = vshrl.u32 %v856, 16
          %v859 = vcvt.s32.f32 %v857
          %v860 = vcvt.s32.f32 %v858
          %861 = vadd.xlane.f32.xlu0 %v859
          %v862 = vpop.xlane.xlu0 %861
          %863 = vadd.xlane.f32.xlu0 %v860
          %v864 = vpop.xlane.xlu0 %863
          %v865 = vcvt.f32.s32 %v862
          %v866 = vcvt.f32.s32 %v864
          %v867 = vshll.u32 %v866, 16
          %v868 = vadd.s32 %v867, %v865
          %vm869 = vcmp.ge.s32.totalorder %v868, 98
          %v870 = vsel %vm869, %v844, %v849
          %v871 = vsel %vm869, %v849, %v845
          %v872 = vand.u32 %v870, %v871
          %v873 = vxor.u32 %v870, %v871
          %v874 = vshra.s32 %v873, 1
          %v875 = vadd.s32 %v872, %v874
          %vm876 = vcmp.le.s32.totalorder %v327, %v875
          %vm877 = vcmp.le.s32.totalorder %v328, %v875
          %v878 = vsel %vm876, 1, 0
          %v879 = vsel %vm877, 1, 0
          %v880 = vsel %vm333, %v878, 0
          %v881 = vsel %vm333, %v879, 0
          %v882 = vadd.s32 %v880, %v881
          %v883 = vand.u32 %v882, 65535
          %v884 = vshrl.u32 %v882, 16
          %v885 = vcvt.s32.f32 %v883
          %v886 = vcvt.s32.f32 %v884
          %887 = vadd.xlane.f32.xlu0 %v885
          %v888 = vpop.xlane.xlu0 %887
          %889 = vadd.xlane.f32.xlu0 %v886
          %v890 = vpop.xlane.xlu0 %889
          %v891 = vcvt.f32.s32 %v888
          %v892 = vcvt.f32.s32 %v890
          %v893 = vshll.u32 %v892, 16
          %v894 = vadd.s32 %v893, %v891
          %vm895 = vcmp.ge.s32.totalorder %v894, 98
          %v896 = vsel %vm895, %v870, %v875
          %v897 = vsel %vm895, %v875, %v871
          %v898 = vand.u32 %v896, %v897
          %v899 = vxor.u32 %v896, %v897
          %v900 = vshra.s32 %v899, 1
          %v901 = vadd.s32 %v898, %v900
          %vm902 = vcmp.le.s32.totalorder %v327, %v901
          %vm903 = vcmp.le.s32.totalorder %v328, %v901
          %v904 = vsel %vm902, 1, 0
          %v905 = vsel %vm903, 1, 0
          %v906 = vsel %vm333, %v904, 0
          %v907 = vsel %vm333, %v905, 0
          %v908 = vadd.s32 %v906, %v907
          %v909 = vand.u32 %v908, 65535
          %v910 = vshrl.u32 %v908, 16
          %v911 = vcvt.s32.f32 %v909
          %v912 = vcvt.s32.f32 %v910
          %913 = vadd.xlane.f32.xlu0 %v911
          %v914 = vpop.xlane.xlu0 %913
          %915 = vadd.xlane.f32.xlu0 %v912
          %v916 = vpop.xlane.xlu0 %915
          %v917 = vcvt.f32.s32 %v914
          %v918 = vcvt.f32.s32 %v916
          %v919 = vshll.u32 %v918, 16
          %v920 = vadd.s32 %v919, %v917
          %vm921 = vcmp.ge.s32.totalorder %v920, 98
          %v922 = vsel %vm921, %v896, %v901
          %v923 = vsel %vm921, %v901, %v897
          %v924 = vand.u32 %v922, %v923
          %v925 = vxor.u32 %v922, %v923
          %v926 = vshra.s32 %v925, 1
          %v927 = vadd.s32 %v924, %v926
          %vm928 = vcmp.le.s32.totalorder %v327, %v927
          %vm929 = vcmp.le.s32.totalorder %v328, %v927
          %v930 = vsel %vm928, 1, 0
          %v931 = vsel %vm929, 1, 0
          %v932 = vsel %vm333, %v930, 0
          %v933 = vsel %vm333, %v931, 0
          %v934 = vadd.s32 %v932, %v933
          %v935 = vand.u32 %v934, 65535
          %v936 = vshrl.u32 %v934, 16
          %v937 = vcvt.s32.f32 %v935
          %v938 = vcvt.s32.f32 %v936
          %939 = vadd.xlane.f32.xlu0 %v937
          %v940 = vpop.xlane.xlu0 %939
          %941 = vadd.xlane.f32.xlu0 %v938
          %v942 = vpop.xlane.xlu0 %941
          %v943 = vcvt.f32.s32 %v940
          %v944 = vcvt.f32.s32 %v942
          %v945 = vshll.u32 %v944, 16
          %v946 = vadd.s32 %v945, %v943
          %vm947 = vcmp.ge.s32.totalorder %v946, 98
          %v948 = vsel %vm947, %v922, %v927
          %v949 = vsel %vm947, %v927, %v923
          %v950 = vand.u32 %v948, %v949
          %v951 = vxor.u32 %v948, %v949
          %v952 = vshra.s32 %v951, 1
          %v953 = vadd.s32 %v950, %v952
          %vm954 = vcmp.le.s32.totalorder %v327, %v953
          %vm955 = vcmp.le.s32.totalorder %v328, %v953
          %v956 = vsel %vm954, 1, 0
          %v957 = vsel %vm955, 1, 0
          %v958 = vsel %vm333, %v956, 0
          %v959 = vsel %vm333, %v957, 0
          %v960 = vadd.s32 %v958, %v959
          %v961 = vand.u32 %v960, 65535
          %v962 = vshrl.u32 %v960, 16
          %v963 = vcvt.s32.f32 %v961
          %v964 = vcvt.s32.f32 %v962
          %965 = vadd.xlane.f32.xlu0 %v963
          %v966 = vpop.xlane.xlu0 %965
          %967 = vadd.xlane.f32.xlu0 %v964
          %v968 = vpop.xlane.xlu0 %967
          %v969 = vcvt.f32.s32 %v966
          %v970 = vcvt.f32.s32 %v968
          %v971 = vshll.u32 %v970, 16
          %v972 = vadd.s32 %v971, %v969
          %vm973 = vcmp.ge.s32.totalorder %v972, 98
          %v974 = vsel %vm973, %v948, %v953
          %v975 = vsel %vm973, %v953, %v949
          %v976 = vand.u32 %v974, %v975
          %v977 = vxor.u32 %v974, %v975
          %v978 = vshra.s32 %v977, 1
          %v979 = vadd.s32 %v976, %v978
          %vm980 = vcmp.le.s32.totalorder %v327, %v979
          %vm981 = vcmp.le.s32.totalorder %v328, %v979
          %v982 = vsel %vm980, 1, 0
          %v983 = vsel %vm981, 1, 0
          %v984 = vsel %vm333, %v982, 0
          %v985 = vsel %vm333, %v983, 0
          %v986 = vadd.s32 %v984, %v985
          %v987 = vand.u32 %v986, 65535
          %v988 = vshrl.u32 %v986, 16
          %v989 = vcvt.s32.f32 %v987
          %v990 = vcvt.s32.f32 %v988
          %991 = vadd.xlane.f32.xlu0 %v989
          %v992 = vpop.xlane.xlu0 %991
          %993 = vadd.xlane.f32.xlu0 %v990
          %v994 = vpop.xlane.xlu0 %993
          %v995 = vcvt.f32.s32 %v992
          %v996 = vcvt.f32.s32 %v994
          %v997 = vshll.u32 %v996, 16
          %v998 = vadd.s32 %v997, %v995
          %vm999 = vcmp.ge.s32.totalorder %v998, 98
          %v1000 = vsel %vm999, %v974, %v979
          %v1001 = vsel %vm999, %v979, %v975
          %v1002 = vand.u32 %v1000, %v1001
          %v1003 = vxor.u32 %v1000, %v1001
          %v1004 = vshra.s32 %v1003, 1
          %v1005 = vadd.s32 %v1002, %v1004
          %vm1006 = vcmp.le.s32.totalorder %v327, %v1005
          %vm1007 = vcmp.le.s32.totalorder %v328, %v1005
          %v1008 = vsel %vm1006, 1, 0
          %v1009 = vsel %vm1007, 1, 0
          %v1010 = vsel %vm333, %v1008, 0
          %v1011 = vsel %vm333, %v1009, 0
          %v1012 = vadd.s32 %v1010, %v1011
          %v1013 = vand.u32 %v1012, 65535
          %v1014 = vshrl.u32 %v1012, 16
          %v1015 = vcvt.s32.f32 %v1013
          %v1016 = vcvt.s32.f32 %v1014
          %1017 = vadd.xlane.f32.xlu0 %v1015
          %v1018 = vpop.xlane.xlu0 %1017
          %1019 = vadd.xlane.f32.xlu0 %v1016
          %v1020 = vpop.xlane.xlu0 %1019
          %v1021 = vcvt.f32.s32 %v1018
          %v1022 = vcvt.f32.s32 %v1020
          %v1023 = vshll.u32 %v1022, 16
          %v1024 = vadd.s32 %v1023, %v1021
          %vm1025 = vcmp.ge.s32.totalorder %v1024, 98
          %v1026 = vsel %vm1025, %v1000, %v1005
          %v1027 = vsel %vm1025, %v1005, %v1001
          %v1028 = vand.u32 %v1026, %v1027
          %v1029 = vxor.u32 %v1026, %v1027
          %v1030 = vshra.s32 %v1029, 1
          %v1031 = vadd.s32 %v1028, %v1030
          %vm1032 = vcmp.le.s32.totalorder %v327, %v1031
          %vm1033 = vcmp.le.s32.totalorder %v328, %v1031
          %v1034 = vsel %vm1032, 1, 0
          %v1035 = vsel %vm1033, 1, 0
          %v1036 = vsel %vm333, %v1034, 0
          %v1037 = vsel %vm333, %v1035, 0
          %v1038 = vadd.s32 %v1036, %v1037
          %v1039 = vand.u32 %v1038, 65535
          %v1040 = vshrl.u32 %v1038, 16
          %v1041 = vcvt.s32.f32 %v1039
          %v1042 = vcvt.s32.f32 %v1040
          %1043 = vadd.xlane.f32.xlu0 %v1041
          %v1044 = vpop.xlane.xlu0 %1043
          %1045 = vadd.xlane.f32.xlu0 %v1042
          %v1046 = vpop.xlane.xlu0 %1045
          %v1047 = vcvt.f32.s32 %v1044
          %v1048 = vcvt.f32.s32 %v1046
          %v1049 = vshll.u32 %v1048, 16
          %v1050 = vadd.s32 %v1049, %v1047
          %vm1051 = vcmp.ge.s32.totalorder %v1050, 98
          %v1052 = vsel %vm1051, %v1026, %v1031
          %v1053 = vsel %vm1051, %v1031, %v1027
          %v1054 = vand.u32 %v1052, %v1053
          %v1055 = vxor.u32 %v1052, %v1053
          %v1056 = vshra.s32 %v1055, 1
          %v1057 = vadd.s32 %v1054, %v1056
          %vm1058 = vcmp.le.s32.totalorder %v327, %v1057
          %vm1059 = vcmp.le.s32.totalorder %v328, %v1057
          %v1060 = vsel %vm1058, 1, 0
          %v1061 = vsel %vm1059, 1, 0
          %v1062 = vsel %vm333, %v1060, 0
          %v1063 = vsel %vm333, %v1061, 0
          %v1064 = vadd.s32 %v1062, %v1063
          %v1065 = vand.u32 %v1064, 65535
          %v1066 = vshrl.u32 %v1064, 16
          %v1067 = vcvt.s32.f32 %v1065
          %v1068 = vcvt.s32.f32 %v1066
          %1069 = vadd.xlane.f32.xlu0 %v1067
          %v1070 = vpop.xlane.xlu0 %1069
          %1071 = vadd.xlane.f32.xlu0 %v1068
          %v1072 = vpop.xlane.xlu0 %1071
          %v1073 = vcvt.f32.s32 %v1070
          %v1074 = vcvt.f32.s32 %v1072
          %v1075 = vshll.u32 %v1074, 16
          %v1076 = vadd.s32 %v1075, %v1073
          %vm1077 = vcmp.ge.s32.totalorder %v1076, 98
          %v1078 = vsel %vm1077, %v1052, %v1057
          %v1079 = vsel %vm1077, %v1057, %v1053
          %v1080 = vand.u32 %v1078, %v1079
          %v1081 = vxor.u32 %v1078, %v1079
          %v1082 = vshra.s32 %v1081, 1
          %v1083 = vadd.s32 %v1080, %v1082
          %vm1084 = vcmp.le.s32.totalorder %v327, %v1083
          %vm1085 = vcmp.le.s32.totalorder %v328, %v1083
          %v1086 = vsel %vm1084, 1, 0
          %v1087 = vsel %vm1085, 1, 0
          %v1088 = vsel %vm333, %v1086, 0
          %v1089 = vsel %vm333, %v1087, 0
          %v1090 = vadd.s32 %v1088, %v1089
          %v1091 = vand.u32 %v1090, 65535
          %v1092 = vshrl.u32 %v1090, 16
          %v1093 = vcvt.s32.f32 %v1091
          %v1094 = vcvt.s32.f32 %v1092
          %1095 = vadd.xlane.f32.xlu0 %v1093
          %v1096 = vpop.xlane.xlu0 %1095
          %1097 = vadd.xlane.f32.xlu0 %v1094
          %v1098 = vpop.xlane.xlu0 %1097
          %v1099 = vcvt.f32.s32 %v1096
          %v1100 = vcvt.f32.s32 %v1098
          %v1101 = vshll.u32 %v1100, 16
          %v1102 = vadd.s32 %v1101, %v1099
          %vm1103 = vcmp.ge.s32.totalorder %v1102, 98
          %v1104 = vsel %vm1103, %v1078, %v1083
          %v1105 = vsel %vm1103, %v1083, %v1079
          %v1106 = vand.u32 %v1104, %v1105
          %v1107 = vxor.u32 %v1104, %v1105
          %v1108 = vshra.s32 %v1107, 1
          %v1109 = vadd.s32 %v1106, %v1108
          %vm1110 = vcmp.le.s32.totalorder %v327, %v1109
          %vm1111 = vcmp.le.s32.totalorder %v328, %v1109
          %v1112 = vsel %vm1110, 1, 0
          %v1113 = vsel %vm1111, 1, 0
          %v1114 = vsel %vm333, %v1112, 0
          %v1115 = vsel %vm333, %v1113, 0
          %v1116 = vadd.s32 %v1114, %v1115
          %v1117 = vand.u32 %v1116, 65535
          %v1118 = vshrl.u32 %v1116, 16
          %v1119 = vcvt.s32.f32 %v1117
          %v1120 = vcvt.s32.f32 %v1118
          %1121 = vadd.xlane.f32.xlu0 %v1119
          %v1122 = vpop.xlane.xlu0 %1121
          %1123 = vadd.xlane.f32.xlu0 %v1120
          %v1124 = vpop.xlane.xlu0 %1123
          %v1125 = vcvt.f32.s32 %v1122
          %v1126 = vcvt.f32.s32 %v1124
          %v1127 = vshll.u32 %v1126, 16
          %v1128 = vadd.s32 %v1127, %v1125
          %vm1129 = vcmp.ge.s32.totalorder %v1128, 98
          %v1130 = vsel %vm1129, %v1104, %v1109
          %v1131 = vsel %vm1129, %v1109, %v1105
          %v1132 = vand.u32 %v1130, %v1131
          %v1133 = vxor.u32 %v1130, %v1131
          %v1134 = vshra.s32 %v1133, 1
          %v1135 = vadd.s32 %v1132, %v1134
          %vm1136 = vcmp.le.s32.totalorder %v327, %v1135
          %vm1137 = vcmp.le.s32.totalorder %v328, %v1135
          %v1138 = vsel %vm1136, 1, 0
          %v1139 = vsel %vm1137, 1, 0
          %v1140 = vsel %vm333, %v1138, 0
          %v1141 = vsel %vm333, %v1139, 0
          %v1142 = vadd.s32 %v1140, %v1141
          %v1143 = vand.u32 %v1142, 65535
          %v1144 = vshrl.u32 %v1142, 16
          %v1145 = vcvt.s32.f32 %v1143
          %v1146 = vcvt.s32.f32 %v1144
          %1147 = vadd.xlane.f32.xlu0 %v1145
          %v1148 = vpop.xlane.xlu0 %1147
          %1149 = vadd.xlane.f32.xlu0 %v1146
          %v1150 = vpop.xlane.xlu0 %1149
          %v1151 = vcvt.f32.s32 %v1148
          %v1152 = vcvt.f32.s32 %v1150
          %v1153 = vshll.u32 %v1152, 16
          %v1154 = vadd.s32 %v1153, %v1151
          %vm1155 = vcmp.ge.s32.totalorder %v1154, 98
          %v1156 = vsel %vm1155, %v1135, %v1131
          %vm1157 = vcmp.gt.s32.totalorder %v327, %v1156
          %vm1158 = vcmp.gt.s32.totalorder %v328, %v1156
          %v1159 = vsel %vm1157, 1, 0
          %v1160 = vsel %vm1158, 1, 0
          %v1161 = vcombine.low %v1159, %v1160
          %v1163 = vunpack.c.l.s4 1966171168
          %v1164 = vunpack.c.0.s8 %v1163
          %v1165 = vlaneseq
          %v1166 = vshrl.u32 %v1165, 7
          %v1167 = vsub.s32 %v1164, %v1166
          %v1168 = vrot.slane %v1161, %v1167
          %v1170 = vunpack.c.l.s4 1966171168
          %v1171 = vunpack.c.0.s8 %v1170
          %v1172 = vlaneseq
          %v1173 = vshrl.u32 %v1172, 7
          %v1174 = vsub.s32 %v1171, %v1173
          %v1175 = vrot.slane %v1168, %v1174
          %1176 = vst.msk [vmem:[%s223] sm:$0x3] %vm300, %v1175
        $region44: #{tpu_custom_call.1} parent=27 // pred_fallthru
          _
        %s1177 = sand.u32 %s98, 1
        %s1178 = scalar_lea.sflag [#allocation5], %s1177
        %s1179 = sand.u32 %s98, 1
        %s1180 = smul.addr %s1179, 2
        %s1181 = scalar_lea.vmem [#allocation8], %s1180
        // Predicated region
        $region45: #{tpu_custom_call.1} parent=27 // pred_check
          %p1182 = pneg %p108
        $region46: #{tpu_custom_call.1} parent=27 // pred_check_branch
          %1184 = sbr.rel (%p1182) target = $region48
        $region47: #{tpu_custom_call.1} parent=27 // pred_region
          %s1186 = ssub.s32 32, 32
          %1187 = vsyncadd %s1178, %s1186
          %s1188 = smul.addr %s26, 2
          %s1189 = smul.addr %s1188, 16
          %s1190 = scalar_lea.hbm %s2, %s1189
          %s1192 = sshll.u32 %s1181, 4
          %s1193 = int_to_ptr.vmem [resolvable:$true] %s1192
          %1195 = dma.vmem_to_hbm [thread:$0]  %s1193, 32, %s1190, %s1178
        $region48: #{tpu_custom_call.1} parent=27 // pred_fallthru
          _
      $region28: #{tpu_custom_call.1} parent=5 // pred_fallthru
        _
      %p1196 = scmp.le.s32.totalorder 2, %s17
      // Predicated region
      $region49: #{tpu_custom_call.1} parent=5 // pred_check
        %p1197 = pneg %p1196
      $region50: #{tpu_custom_call.1} parent=5 // pred_check_branch
        %1199 = sbr.rel (%p1197) target = $region52
      $region51: #{tpu_custom_call.1} parent=5 // pred_region
        %s1200 = ssub.s32 %s17, 2
        // Predicated region
        $region53: #{tpu_custom_call.1} parent=51 // pred_check
          %p1201 = pneg %p114
        $region54: #{tpu_custom_call.1} parent=51 // pred_check_branch
          %1203 = sbr.rel (%p1201) target = $region56
        $region55: #{tpu_custom_call.1} parent=51 // pred_region
          %s1204 = sand.u32 %s99, 1
          %s1205 = scalar_lea.sflag [#allocation5], %s1204
          %s1206 = sand.u32 %s99, 1
          %s1207 = smul.addr %s1206, 2
          %s1208 = scalar_lea.vmem [#allocation8], %s1207
          %1209 = dma.done %s1205, 32
        $region56: #{tpu_custom_call.1} parent=51 // pred_fallthru
          _
      $region52: #{tpu_custom_call.1} parent=5 // pred_fallthru
        _
    $region6: #{tpu_custom_call.1} parent=1 // loop_footer
      %s21 = sadd.s32 1, %s17
    $region7: #{tpu_custom_call.1} parent=1 // loop_footer_branch
      %16 = sbr.rel target = $region3
    $region8: #{tpu_custom_call.1} parent=1 // loop_exit
      _
    %1210 = vsyncpa [#allocation4], 1
    %s1211 = scalar_lea.sflag [#allocation4], 1
    %1212 = vsyncpa %s1211, 1
    %1213 = vsyncpa [#allocation7], 1
    %s1214 = scalar_lea.sflag [#allocation7], 1
    %1215 = vsyncpa %s1214, 1
    %1216 = vsyncpa [#allocation5], 1
    %s1217 = scalar_lea.sflag [#allocation5], 1
    %1218 = vsyncpa %s1217, 1

</llo_original>
